<compile_context>
chip_gen: v5e
topology: v5e:2x2
jax: 0.10.0
libtpu: 0.0.40
codegen_flags: <defaults>
</compile_context>

<pallas_src>
import functools

import jax
import jax.numpy as jnp
import numpy as np
from jax.experimental import pallas as pl
from jax.experimental.pallas import tpu as pltpu

GN_EPS = 1e-5  # torch.nn.GroupNorm default


# ----------------------------------------------------------------------------
# Fused kernel
# ----------------------------------------------------------------------------
def _make_resnet_block_kernel(H, W):
    HW = H * W
    # Zero rows above/below the flattened image; >= W+1 and 8-aligned so the
    # interior store / center-tap loads sit on (8,128) sublane boundaries.
    PAD = ((W + 1 + 7) // 8) * 8

    def kernel(x_ref, t_ref,
               g1_ref, b1_ref, p1_ref, w1_ref, cb1_ref,
               wd_ref, bd_ref,
               g2_ref, b2_ref, p2_ref, w2m_ref, cb2m_ref,
               o_ref, pad1_ref, pad2_ref):
        f32 = jnp.float32
        cdtype = w1_ref.dtype  # MXU operand dtype (bf16 for perf, f32 exact)

        # Column masks shared by both convs: a tap with dx==0 must not read
        # the previous row's last pixel (x==0); dx==2 must not read the next
        # row's first pixel (x==W-1).  Top/bottom taps hit the zero pad rows.
        col = jax.lax.broadcasted_iota(jnp.int32, (HW, 1), 0) % W
        not_left = col != 0
        not_right = col != (W - 1)

        def group_norm_silu(v, gamma_ref, beta_ref, p_ref):
            # v: (HW, C) f32.  P is the precomputed (C, C) group-averaging
            # matrix; two-pass mean/var for stability, all stats in f32.
            s_c = jnp.sum(v, axis=0, keepdims=True)                    # (1,C)
            mean_c = jnp.dot(s_c, p_ref[...], preferred_element_type=f32)
            d = v - mean_c
            ss_c = jnp.sum(d * d, axis=0, keepdims=True)
            var_c = jnp.dot(ss_c, p_ref[...], preferred_element_type=f32)
            y = (d * jax.lax.rsqrt(var_c + GN_EPS) * gamma_ref[...]
                 + beta_ref[...])
            return y * jax.nn.sigmoid(y)                               # SiLU

        def fill_padded(pad_ref, h):
            # Only the pad-row slices are zeroed (cheap + core-safe); the
            # interior rows are fully overwritten with h every step.
            c = pad_ref.shape[1]
            pad_ref[pl.ds(0, PAD), :] = jnp.zeros((PAD, c), f32)
            pad_ref[pl.ds(PAD + HW, PAD), :] = jnp.zeros((PAD, c), f32)
            pad_ref[pl.ds(PAD, HW), :] = h

        def conv_lhs(pad_ref, extra=None):
            # Build the (HW, 9*C [+ Cin]) shifted+masked stack for one GEMM.
            parts = []
            for k in range(9):
                dy, dx = divmod(k, 3)
                s = pad_ref[pl.ds(PAD + (dy - 1) * W + (dx - 1), HW), :]
                if dx == 0:
                    s = jnp.where(not_left, s, 0.0)
                elif dx == 2:
                    s = jnp.where(not_right, s, 0.0)
                parts.append(s)
            if extra is not None:
                parts.append(extra)
            return jnp.concatenate(parts, axis=1).astype(cdtype)

        # x arrives channel-major (Cin, HW); one XLU transpose puts channels
        # on the lane axis (hidden under the surrounding MXU work).
        x = jnp.transpose(x_ref[0])                                    # (HW,Cin)

        # h = SiLU(GroupNorm1(x))
        h = group_norm_silu(x, g1_ref, b1_ref, p1_ref)

        # h = conv_1(h): one GEMM, K = 9*Cin
        fill_padded(pad1_ref, h)
        h = jnp.dot(conv_lhs(pad1_ref), w1_ref[...],
                    preferred_element_type=f32)

        # h += conv_1 bias + dense_1(SiLU(t)) broadcast over pixels
        tv = t_ref[0]                                                  # (1,T)
        temb = jnp.dot((tv * jax.nn.sigmoid(tv)).astype(cdtype), wd_ref[...],
                       preferred_element_type=f32) + bd_ref[...]       # (1,Cout)
        h = h + (cb1_ref[...] + temb)

        # h = SiLU(GroupNorm2(h))
        h = group_norm_silu(h, g2_ref, b2_ref, p2_ref)
        # TODO(synk): nn.Dropout2d(p=0.1) is train-only stochastic; identity here.

        # h = conv_2(h) + match_input(x): ONE GEMM with x folded in as extra
        # K columns (K = 9*Cout + Cin); conv_2/match biases pre-summed.
        fill_padded(pad2_ref, h)
        out = jnp.dot(conv_lhs(pad2_ref, extra=x), w2m_ref[...],
                      preferred_element_type=f32) + cb2m_ref[...]

        # attention == nn.Identity() (apply_attention=False).
        # Emit channel-major (Cout, HW) so the wrapper reshapes straight to
        # NCHW with no XLA transpose.
        o_ref[0] = jnp.transpose(out).astype(o_ref.dtype)

    return kernel, PAD


# ----------------------------------------------------------------------------
# Wrapper
# ----------------------------------------------------------------------------
def _group_avg_matrix(c, g, hw):
    gid = np.arange(c) // (c // g)
    same = (gid[:, None] == gid[None, :]).astype(np.float32)
    return jnp.asarray(same / float(hw * (c // g)))


def resnet_block_forward(params, x_nchw, t, *, num_groups=8, use_bf16=True):
    B, Cin, H, W = x_nchw.shape
    Cout = params["conv1_w"].shape[3]
    T = t.shape[1]
    HW = H * W
    cdtype = jnp.bfloat16 if use_bf16 else jnp.float32

    kernel, PAD = _make_resnet_block_kernel(H, W)

    # NCHW -> (B, Cin, HW) is a free reshape (no XLA transpose); the kernel
    # does the per-image (Cin, HW) -> (HW, Cin) transpose on the XLU.
    x_flat = x_nchw.reshape(B, Cin, HW).astype(jnp.float32)
    t3 = t.reshape(B, 1, T).astype(jnp.float32)

    # Weights packed for one-GEMM-per-conv; match_input folded into conv_2.
    w1 = params["conv1_w"].reshape(9 * Cin, Cout).astype(cdtype)
    w2m = jnp.concatenate(
        [params["conv2_w"].reshape(9 * Cout, Cout), params["match_w"]],
        axis=0).astype(cdtype)                                 # (9*Cout+Cin, Cout)
    wd = params["dense_w"].astype(cdtype)
    cb1 = params["conv1_b"].reshape(1, Cout).astype(jnp.float32)
    cb2m = (params["conv2_b"] + params["match_b"]).reshape(1, Cout).astype(
        jnp.float32)
    bd = params["dense_b"].reshape(1, Cout).astype(jnp.float32)
    g1 = params["gn1_gamma"].reshape(1, Cin).astype(jnp.float32)
    b1 = params["gn1_beta"].reshape(1, Cin).astype(jnp.float32)
    g2 = params["gn2_gamma"].reshape(1, Cout).astype(jnp.float32)
    b2 = params["gn2_beta"].reshape(1, Cout).astype(jnp.float32)
    p1 = _group_avg_matrix(Cin, num_groups, HW)
    p2 = _group_avg_matrix(Cout, num_groups, HW)

    operands = (x_flat, t3, g1, b1, p1, w1, cb1, wd, bd,
                g2, b2, p2, w2m, cb2m)

    def full_spec(a):
        nd = a.ndim
        return pl.BlockSpec(a.shape, lambda b: (0,) * nd)

    in_specs = [
        pl.BlockSpec((1, Cin, HW), lambda b: (b, 0, 0)),
        pl.BlockSpec((1, 1, T), lambda b: (b, 0, 0)),
    ] + [full_spec(a) for a in operands[2:]]

    flops = int(2 * B * HW * ((9 * Cin) * Cout + (9 * Cout + Cin) * Cout)
                + 2 * B * T * Cout
                + 4 * B * (Cin * Cin + Cout * Cout))
    transcendentals = int(B * (HW * (Cin + Cout) + T + Cin + Cout))
    bytes_accessed = int(sum(int(np.prod(a.shape)) * a.dtype.itemsize
                             for a in operands) + B * HW * Cout * 4)

    out_flat = pl.pallas_call(
        kernel,
        out_shape=jax.ShapeDtypeStruct((B, Cout, HW), jnp.float32),
        grid=(B,),
        in_specs=in_specs,
        out_specs=pl.BlockSpec((1, Cout, HW), lambda b: (b, 0, 0)),
        scratch_shapes=[
            pltpu.VMEM((HW + 2 * PAD, Cin), jnp.float32),   # padded h1
            pltpu.VMEM((HW + 2 * PAD, Cout), jnp.float32),  # padded h2
        ],
        compiler_params=pltpu.CompilerParams(
            dimension_semantics=("parallel",)),
        cost_estimate=pl.CostEstimate(
            flops=flops, transcendentals=transcendentals,
            bytes_accessed=bytes_accessed),
    )(*operands)

    return out_flat.reshape(B, Cout, H, W)


# ----------------------------------------------------------------------------
# Pure-JAX reference
# ----------------------------------------------------------------------------
def ref_forward(params, x, t):
    def gn(v, gamma, beta, G=8):
        B, C, H, W = v.shape
        vg = v.reshape(B, G, C // G, H, W)
        mean = vg.mean(axis=(2, 3, 4), keepdims=True)
        var = ((vg - mean) ** 2).mean(axis=(2, 3, 4), keepdims=True)
        vn = ((vg - mean) / jnp.sqrt(var + GN_EPS)).reshape(B, C, H, W)
        return vn * gamma[None, :, None, None] + beta[None, :, None, None]

    def silu(v):
        return v * jax.nn.sigmoid(v)

    def conv(v, w_hwio, b):
        out = jax.lax.conv_general_dilated(
            v, w_hwio, (1, 1), "SAME",
            dimension_numbers=("NCHW", "HWIO", "NCHW"))
        return out + b[None, :, None, None]

    h = silu(gn(x, params["gn1_gamma"], params["gn1_beta"]))
    h = conv(h, params["conv1_w"], params["conv1_b"])
    temb = silu(t) @ params["dense_w"] + params["dense_b"]
    h = h + temb[:, :, None, None]
    h = silu(gn(h, params["gn2_gamma"], params["gn2_beta"]))
    h = conv(h, params["conv2_w"], params["conv2_b"])
    match = (jnp.einsum("bchw,cd->bdhw", x, params["match_w"])
             + params["match_b"][None, :, None, None])
    return h + match


# ----------------------------------------------------------------------------
if __name__ == "__main__":
    # Small shapes consistent with the module: in=16, out=32 channels (both
    # divisible by num_groups=8), 8x8 spatial, time_emb_dims=32.
    B, Cin, Cout, H, W, T = 2, 16, 32, 8, 8, 32

    ks = jax.random.split(jax.random.PRNGKey(0), 14)
    params = {
        "gn1_gamma": 1.0 + 0.1 * jax.random.normal(ks[0], (Cin,), jnp.float32),
        "gn1_beta": 0.1 * jax.random.normal(ks[1], (Cin,), jnp.float32),
        # conv_1: HWIO (3, 3, Cin, Cout)
        "conv1_w": 0.1 * jax.random.normal(ks[2], (3, 3, Cin, Cout), jnp.float32),
        "conv1_b": 0.1 * jax.random.normal(ks[3], (Cout,), jnp.float32),
        # dense_1: stored (T, Cout)
        "dense_w": 0.1 * jax.random.normal(ks[4], (T, Cout), jnp.float32),
        "dense_b": 0.1 * jax.random.normal(ks[5], (Cout,), jnp.float32),
        "gn2_gamma": 1.0 + 0.1 * jax.random.normal(ks[6], (Cout,), jnp.float32),
        "gn2_beta": 0.1 * jax.random.normal(ks[7], (Cout,), jnp.float32),
        # conv_2: HWIO (3, 3, Cout, Cout)
        "conv2_w": 0.1 * jax.random.normal(ks[8], (3, 3, Cout, Cout), jnp.float32),
        "conv2_b": 0.1 * jax.random.normal(ks[9], (Cout,), jnp.float32),
        # match_input 1x1 conv: stored (Cin, Cout)
        "match_w": 0.1 * jax.random.normal(ks[10], (Cin, Cout), jnp.float32),
        "match_b": 0.1 * jax.random.normal(ks[11], (Cout,), jnp.float32),
    }
    x = jax.random.normal(ks[12], (B, Cin, H, W), jnp.float32)
    t = jax.random.normal(ks[13], (B, T), jnp.float32)

    ref = ref_forward(params, x, t)

    # Exact-semantics path (f32 MXU operands): tight tolerance.
    fwd_f32 = jax.jit(functools.partial(resnet_block_forward, use_bf16=False))
    out_f32 = jax.block_until_ready(fwd_f32(params, x, t))
    np.testing.assert_allclose(np.asarray(out_f32), np.asarray(ref),
                               rtol=1e-4, atol=1e-4)

    # Perf path (bf16 MXU operands, f32 accumulate / elementwise).
    fwd_bf16 = jax.jit(functools.partial(resnet_block_forward, use_bf16=True))
    out_bf16 = jax.block_until_ready(fwd_bf16(params, x, t))
    np.testing.assert_allclose(np.asarray(out_bf16), np.asarray(ref),
                               rtol=5e-2, atol=5e-2)

    print("KERNEL_OK")
</pallas_src>

<mosaic_0001>
module attributes {stable_mosaic.version = 11 : i64} {
  func.func @kernel(%arg0: i32, %arg1: memref<1x16x64xf32, #tpu.memory_space<vmem>>, %arg2: memref<1x1x32xf32, #tpu.memory_space<vmem>>, %arg3: memref<1x16xf32, #tpu.memory_space<vmem>>, %arg4: memref<1x16xf32, #tpu.memory_space<vmem>>, %arg5: memref<16x16xf32, #tpu.memory_space<vmem>>, %arg6: memref<144x32xf32, #tpu.memory_space<vmem>>, %arg7: memref<1x32xf32, #tpu.memory_space<vmem>>, %arg8: memref<32x32xf32, #tpu.memory_space<vmem>>, %arg9: memref<1x32xf32, #tpu.memory_space<vmem>>, %arg10: memref<1x32xf32, #tpu.memory_space<vmem>>, %arg11: memref<1x32xf32, #tpu.memory_space<vmem>>, %arg12: memref<32x32xf32, #tpu.memory_space<vmem>>, %arg13: memref<304x32xf32, #tpu.memory_space<vmem>>, %arg14: memref<1x32xf32, #tpu.memory_space<vmem>>, %arg15: memref<1x32x64xf32, #tpu.memory_space<vmem>>, %arg16: memref<96x16xf32, #tpu.memory_space<vmem>>, %arg17: memref<96x32xf32, #tpu.memory_space<vmem>>) attributes {dimension_semantics = [#tpu.dimension_semantics<parallel>], iteration_bounds = array<i64: 2>, scalar_prefetch = 0 : i64, scratch_operands = 2 : i64, tpu.core_type = #tpu.core_type<tc>, window_params = [{transform_indices = @transform_0, window_bounds = array<i64: 1, 16, 64>}, {transform_indices = @transform_1, window_bounds = array<i64: 1, 1, 32>}, {pipeline_mode = #tpu.pipeline_mode<synchronous>, transform_indices = @transform_2, window_bounds = array<i64: 1, 16>}, {pipeline_mode = #tpu.pipeline_mode<synchronous>, transform_indices = @transform_3, window_bounds = array<i64: 1, 16>}, {pipeline_mode = #tpu.pipeline_mode<synchronous>, transform_indices = @transform_4, window_bounds = array<i64: 16, 16>}, {pipeline_mode = #tpu.pipeline_mode<synchronous>, transform_indices = @transform_5, window_bounds = array<i64: 144, 32>}, {pipeline_mode = #tpu.pipeline_mode<synchronous>, transform_indices = @transform_6, window_bounds = array<i64: 1, 32>}, {pipeline_mode = #tpu.pipeline_mode<synchronous>, transform_indices = @transform_7, window_bounds = array<i64: 32, 32>}, {pipeline_mode = #tpu.pipeline_mode<synchronous>, transform_indices = @transform_8, window_bounds = array<i64: 1, 32>}, {pipeline_mode = #tpu.pipeline_mode<synchronous>, transform_indices = @transform_9, window_bounds = array<i64: 1, 32>}, {pipeline_mode = #tpu.pipeline_mode<synchronous>, transform_indices = @transform_10, window_bounds = array<i64: 1, 32>}, {pipeline_mode = #tpu.pipeline_mode<synchronous>, transform_indices = @transform_11, window_bounds = array<i64: 32, 32>}, {pipeline_mode = #tpu.pipeline_mode<synchronous>, transform_indices = @transform_12, window_bounds = array<i64: 304, 32>}, {pipeline_mode = #tpu.pipeline_mode<synchronous>, transform_indices = @transform_13, window_bounds = array<i64: 1, 32>}, {transform_indices = @transform_14, window_bounds = array<i64: 1, 32, 64>}]} {
    %0 = tpu.iota {dimensions = array<i32: 0>} : vector<64x1xi32>
    %c8_i32 = arith.constant 8 : i32
    %c0_i32 = arith.constant 0 : i32
    %1 = arith.cmpi eq, %c8_i32, %c0_i32 : i32
    %c1_i32 = arith.constant 1 : i32
    %2 = arith.select %1, %c1_i32, %c8_i32 : i32
    %3 = vector.broadcast %2 : i32 to vector<64x1xi32>
    %4 = arith.remsi %0, %3 : vector<64x1xi32>
    %c0_i32_0 = arith.constant 0 : i32
    %5 = vector.broadcast %c0_i32_0 : i32 to vector<64x1xi32>
    %6 = arith.cmpi ne, %4, %5 : vector<64x1xi32>
    %c0_i32_1 = arith.constant 0 : i32
    %7 = vector.broadcast %c0_i32_1 : i32 to vector<64x1xi32>
    %8 = arith.cmpi slt, %4, %7 : vector<64x1xi32>
    %c0_i32_2 = arith.constant 0 : i32
    %9 = arith.cmpi slt, %2, %c0_i32_2 : i32
    %10 = vector.broadcast %9 : i1 to vector<64x1xi1>
    %11 = vector.broadcast %10 : vector<64x1xi1> to vector<64x1xi1>
    %12 = arith.xori %8, %11 : vector<64x1xi1>
    %13 = arith.andi %12, %6 : vector<64x1xi1>
    %14 = vector.broadcast %2 : i32 to vector<64x1xi32>
    %15 = arith.addi %4, %14 : vector<64x1xi32>
    %16 = arith.select %13, %15, %4 : vector<64x1xi1>, vector<64x1xi32>
    %c0_i32_3 = arith.constant 0 : i32
    %17 = vector.broadcast %c0_i32_3 : i32 to vector<64x1xi32>
    %18 = arith.cmpi ne, %16, %17 : vector<64x1xi32>
    %c7_i32 = arith.constant 7 : i32
    %19 = vector.broadcast %c7_i32 : i32 to vector<64x1xi32>
    %20 = arith.cmpi ne, %16, %19 : vector<64x1xi32>
    %c0 = arith.constant 0 : index
    %c0_4 = arith.constant 0 : index
    %c0_5 = arith.constant 0 : index
    %21 = vector.load %arg1[%c0, %c0_4, %c0_5] : memref<1x16x64xf32, #tpu.memory_space<vmem>>, vector<1x16x64xf32>
    %22 = vector.shape_cast %21 : vector<1x16x64xf32> to vector<16x64xf32>
    %23 = tpu.transpose %22, [1, 0] : vector<16x64xf32> -> vector<64x16xf32>
    %cst = arith.constant dense<0.000000e+00> : vector<16xf32>
    %24 = vector.multi_reduction <add>, %23, %cst [0] : vector<64x16xf32> to vector<16xf32>
    %25 = vector.shape_cast %24 : vector<16xf32> to vector<1x16xf32>
    %c0_6 = arith.constant 0 : index
    %c0_7 = arith.constant 0 : index
    %26 = vector.load %arg5[%c0_6, %c0_7] : memref<16x16xf32, #tpu.memory_space<vmem>>, vector<16x16xf32>
    %cst_8 = arith.constant dense<0.000000e+00> : vector<1x16xf32>
    %27 = tpu.matmul %25, %26, %cst_8 {dimension_numbers = #tpu.dot_dimension_numbers<[1], [0], [0], [1], [0, 0, 1, 1], [], []>} : vector<1x16xf32>, vector<16x16xf32>, vector<1x16xf32> -> vector<1x16xf32>
    %28 = vector.broadcast %27 : vector<1x16xf32> to vector<64x16xf32>
    %29 = arith.subf %23, %28 : vector<64x16xf32>
    %30 = arith.mulf %29, %29 : vector<64x16xf32>
    %cst_9 = arith.constant dense<0.000000e+00> : vector<16xf32>
    %31 = vector.multi_reduction <add>, %30, %cst_9 [0] : vector<64x16xf32> to vector<16xf32>
    %32 = vector.shape_cast %31 : vector<16xf32> to vector<1x16xf32>
    %c0_10 = arith.constant 0 : index
    %c0_11 = arith.constant 0 : index
    %33 = vector.load %arg5[%c0_10, %c0_11] : memref<16x16xf32, #tpu.memory_space<vmem>>, vector<16x16xf32>
    %cst_12 = arith.constant dense<0.000000e+00> : vector<1x16xf32>
    %34 = tpu.matmul %32, %33, %cst_12 {dimension_numbers = #tpu.dot_dimension_numbers<[1], [0], [0], [1], [0, 0, 1, 1], [], []>} : vector<1x16xf32>, vector<16x16xf32>, vector<1x16xf32> -> vector<1x16xf32>
    %cst_13 = arith.constant 9.99999974E-6 : f32
    %35 = vector.broadcast %cst_13 : f32 to vector<1x16xf32>
    %36 = arith.addf %34, %35 : vector<1x16xf32>
    %37 = math.rsqrt %36 : vector<1x16xf32>
    %38 = vector.broadcast %37 : vector<1x16xf32> to vector<64x16xf32>
    %39 = arith.mulf %29, %38 : vector<64x16xf32>
    %c0_14 = arith.constant 0 : index
    %c0_15 = arith.constant 0 : index
    %40 = vector.load %arg3[%c0_14, %c0_15] : memref<1x16xf32, #tpu.memory_space<vmem>>, vector<1x16xf32>
    %41 = vector.broadcast %40 : vector<1x16xf32> to vector<64x16xf32>
    %42 = arith.mulf %39, %41 : vector<64x16xf32>
    %c0_16 = arith.constant 0 : index
    %c0_17 = arith.constant 0 : index
    %43 = vector.load %arg4[%c0_16, %c0_17] : memref<1x16xf32, #tpu.memory_space<vmem>>, vector<1x16xf32>
    %44 = vector.broadcast %43 : vector<1x16xf32> to vector<64x16xf32>
    %45 = arith.addf %42, %44 : vector<64x16xf32>
    %46 = arith.negf %45 : vector<64x16xf32>
    %47 = math.exp %46 : vector<64x16xf32>
    %cst_18 = arith.constant 1.000000e+00 : f32
    %48 = vector.broadcast %cst_18 : f32 to vector<64x16xf32>
    %49 = arith.addf %48, %47 : vector<64x16xf32>
    %50 = arith.divf %48, %49 : vector<64x16xf32>
    %51 = arith.mulf %45, %50 : vector<64x16xf32>
    %cst_19 = arith.constant 0.000000e+00 : f32
    %52 = vector.broadcast %cst_19 : f32 to vector<16x16xf32>
    %c0_20 = arith.constant 0 : index
    %c0_21 = arith.constant 0 : index
    %53 = vector.load %arg16[%c0_20, %c0_21] : memref<96x16xf32, #tpu.memory_space<vmem>>, vector<16x16xf32>
    tpu.vector_store %arg16[%c0_20, %c0_21], %52 {strides = array<i32>} : memref<96x16xf32, #tpu.memory_space<vmem>>, vector<16x16xf32>,
    %cst_22 = arith.constant 0.000000e+00 : f32
    %54 = vector.broadcast %cst_22 : f32 to vector<16x16xf32>
    %c80 = arith.constant 80 : index
    %c0_23 = arith.constant 0 : index
    %55 = vector.load %arg16[%c80, %c0_23] : memref<96x16xf32, #tpu.memory_space<vmem>>, vector<16x16xf32>
    tpu.vector_store %arg16[%c80, %c0_23], %54 {strides = array<i32>} : memref<96x16xf32, #tpu.memory_space<vmem>>, vector<16x16xf32>,
    %c16 = arith.constant 16 : index
    %c0_24 = arith.constant 0 : index
    %56 = vector.load %arg16[%c16, %c0_24] : memref<96x16xf32, #tpu.memory_space<vmem>>, vector<64x16xf32>
    tpu.vector_store %arg16[%c16, %c0_24], %51 {strides = array<i32>} : memref<96x16xf32, #tpu.memory_space<vmem>>, vector<64x16xf32>,
    %c7 = arith.constant 7 : index
    %c0_25 = arith.constant 0 : index
    %57 = vector.load %arg16[%c7, %c0_25] : memref<96x16xf32, #tpu.memory_space<vmem>>, vector<64x16xf32>
    %cst_26 = arith.constant 0.000000e+00 : f32
    %58 = vector.shape_cast %18 : vector<64x1xi1> to vector<64x1xi1>
    %59 = vector.broadcast %58 : vector<64x1xi1> to vector<64x16xi1>
    %60 = vector.broadcast %cst_26 : f32 to vector<64x16xf32>
    %61 = arith.select %59, %57, %60 : vector<64x16xi1>, vector<64x16xf32>
    %c8 = arith.constant 8 : index
    %c0_27 = arith.constant 0 : index
    %62 = vector.load %arg16[%c8, %c0_27] : memref<96x16xf32, #tpu.memory_space<vmem>>, vector<64x16xf32>
    %c9 = arith.constant 9 : index
    %c0_28 = arith.constant 0 : index
    %63 = vector.load %arg16[%c9, %c0_28] : memref<96x16xf32, #tpu.memory_space<vmem>>, vector<64x16xf32>
    %cst_29 = arith.constant 0.000000e+00 : f32
    %64 = vector.shape_cast %20 : vector<64x1xi1> to vector<64x1xi1>
    %65 = vector.broadcast %64 : vector<64x1xi1> to vector<64x16xi1>
    %66 = vector.broadcast %cst_29 : f32 to vector<64x16xf32>
    %67 = arith.select %65, %63, %66 : vector<64x16xi1>, vector<64x16xf32>
    %c15 = arith.constant 15 : index
    %c0_30 = arith.constant 0 : index
    %68 = vector.load %arg16[%c15, %c0_30] : memref<96x16xf32, #tpu.memory_space<vmem>>, vector<64x16xf32>
    %cst_31 = arith.constant 0.000000e+00 : f32
    %69 = vector.shape_cast %18 : vector<64x1xi1> to vector<64x1xi1>
    %70 = vector.broadcast %69 : vector<64x1xi1> to vector<64x16xi1>
    %71 = vector.broadcast %cst_31 : f32 to vector<64x16xf32>
    %72 = arith.select %70, %68, %71 : vector<64x16xi1>, vector<64x16xf32>
    %c16_32 = arith.constant 16 : index
    %c0_33 = arith.constant 0 : index
    %73 = vector.load %arg16[%c16_32, %c0_33] : memref<96x16xf32, #tpu.memory_space<vmem>>, vector<64x16xf32>
    %c17 = arith.constant 17 : index
    %c0_34 = arith.constant 0 : index
    %74 = vector.load %arg16[%c17, %c0_34] : memref<96x16xf32, #tpu.memory_space<vmem>>, vector<64x16xf32>
    %cst_35 = arith.constant 0.000000e+00 : f32
    %75 = vector.shape_cast %20 : vector<64x1xi1> to vector<64x1xi1>
    %76 = vector.broadcast %75 : vector<64x1xi1> to vector<64x16xi1>
    %77 = vector.broadcast %cst_35 : f32 to vector<64x16xf32>
    %78 = arith.select %76, %74, %77 : vector<64x16xi1>, vector<64x16xf32>
    %c23 = arith.constant 23 : index
    %c0_36 = arith.constant 0 : index
    %79 = vector.load %arg16[%c23, %c0_36] : memref<96x16xf32, #tpu.memory_space<vmem>>, vector<64x16xf32>
    %cst_37 = arith.constant 0.000000e+00 : f32
    %80 = vector.shape_cast %18 : vector<64x1xi1> to vector<64x1xi1>
    %81 = vector.broadcast %80 : vector<64x1xi1> to vector<64x16xi1>
    %82 = vector.broadcast %cst_37 : f32 to vector<64x16xf32>
    %83 = arith.select %81, %79, %82 : vector<64x16xi1>, vector<64x16xf32>
    %c24 = arith.constant 24 : index
    %c0_38 = arith.constant 0 : index
    %84 = vector.load %arg16[%c24, %c0_38] : memref<96x16xf32, #tpu.memory_space<vmem>>, vector<64x16xf32>
    %c25 = arith.constant 25 : index
    %c0_39 = arith.constant 0 : index
    %85 = vector.load %arg16[%c25, %c0_39] : memref<96x16xf32, #tpu.memory_space<vmem>>, vector<64x16xf32>
    %cst_40 = arith.constant 0.000000e+00 : f32
    %86 = vector.shape_cast %20 : vector<64x1xi1> to vector<64x1xi1>
    %87 = vector.broadcast %86 : vector<64x1xi1> to vector<64x16xi1>
    %88 = vector.broadcast %cst_40 : f32 to vector<64x16xf32>
    %89 = arith.select %87, %85, %88 : vector<64x16xi1>, vector<64x16xf32>
    %90 = tpu.concatenate %61, %62, %67, %72, %73, %78, %83, %84, %89 in 1 : vector<64x16xf32>, vector<64x16xf32>, vector<64x16xf32>, vector<64x16xf32>, vector<64x16xf32>, vector<64x16xf32>, vector<64x16xf32>, vector<64x16xf32>, vector<64x16xf32> -> vector<64x144xf32>
    %c0_41 = arith.constant 0 : index
    %c0_42 = arith.constant 0 : index
    %91 = vector.load %arg6[%c0_41, %c0_42] : memref<144x32xf32, #tpu.memory_space<vmem>>, vector<144x32xf32>
    %cst_43 = arith.constant dense<0.000000e+00> : vector<64x32xf32>
    %92 = tpu.matmul %90, %91, %cst_43 {dimension_numbers = #tpu.dot_dimension_numbers<[1], [0], [0], [1], [0, 0, 1, 1], [], []>} : vector<64x144xf32>, vector<144x32xf32>, vector<64x32xf32> -> vector<64x32xf32>
    %c0_44 = arith.constant 0 : index
    %c0_45 = arith.constant 0 : index
    %c0_46 = arith.constant 0 : index
    %93 = vector.load %arg2[%c0_44, %c0_45, %c0_46] : memref<1x1x32xf32, #tpu.memory_space<vmem>>, vector<1x1x32xf32>
    %94 = vector.shape_cast %93 : vector<1x1x32xf32> to vector<1x32xf32>
    %95 = arith.negf %94 : vector<1x32xf32>
    %96 = math.exp %95 : vector<1x32xf32>
    %cst_47 = arith.constant 1.000000e+00 : f32
    %97 = vector.broadcast %cst_47 : f32 to vector<1x32xf32>
    %98 = arith.addf %97, %96 : vector<1x32xf32>
    %99 = arith.divf %97, %98 : vector<1x32xf32>
    %100 = arith.mulf %94, %99 : vector<1x32xf32>
    %c0_48 = arith.constant 0 : index
    %c0_49 = arith.constant 0 : index
    %101 = vector.load %arg8[%c0_48, %c0_49] : memref<32x32xf32, #tpu.memory_space<vmem>>, vector<32x32xf32>
    %cst_50 = arith.constant dense<0.000000e+00> : vector<1x32xf32>
    %102 = tpu.matmul %100, %101, %cst_50 {dimension_numbers = #tpu.dot_dimension_numbers<[1], [0], [0], [1], [0, 0, 1, 1], [], []>} : vector<1x32xf32>, vector<32x32xf32>, vector<1x32xf32> -> vector<1x32xf32>
    %c0_51 = arith.constant 0 : index
    %c0_52 = arith.constant 0 : index
    %103 = vector.load %arg9[%c0_51, %c0_52] : memref<1x32xf32, #tpu.memory_space<vmem>>, vector<1x32xf32>
    %104 = arith.addf %102, %103 : vector<1x32xf32>
    %c0_53 = arith.constant 0 : index
    %c0_54 = arith.constant 0 : index
    %105 = vector.load %arg7[%c0_53, %c0_54] : memref<1x32xf32, #tpu.memory_space<vmem>>, vector<1x32xf32>
    %106 = arith.addf %105, %104 : vector<1x32xf32>
    %107 = vector.broadcast %106 : vector<1x32xf32> to vector<64x32xf32>
    %108 = arith.addf %92, %107 : vector<64x32xf32>
    %cst_55 = arith.constant dense<0.000000e+00> : vector<32xf32>
    %109 = vector.multi_reduction <add>, %108, %cst_55 [0] : vector<64x32xf32> to vector<32xf32>
    %110 = vector.shape_cast %109 : vector<32xf32> to vector<1x32xf32>
    %c0_56 = arith.constant 0 : index
    %c0_57 = arith.constant 0 : index
    %111 = vector.load %arg12[%c0_56, %c0_57] : memref<32x32xf32, #tpu.memory_space<vmem>>, vector<32x32xf32>
    %cst_58 = arith.constant dense<0.000000e+00> : vector<1x32xf32>
    %112 = tpu.matmul %110, %111, %cst_58 {dimension_numbers = #tpu.dot_dimension_numbers<[1], [0], [0], [1], [0, 0, 1, 1], [], []>} : vector<1x32xf32>, vector<32x32xf32>, vector<1x32xf32> -> vector<1x32xf32>
    %113 = vector.broadcast %112 : vector<1x32xf32> to vector<64x32xf32>
    %114 = arith.subf %108, %113 : vector<64x32xf32>
    %115 = arith.mulf %114, %114 : vector<64x32xf32>
    %cst_59 = arith.constant dense<0.000000e+00> : vector<32xf32>
    %116 = vector.multi_reduction <add>, %115, %cst_59 [0] : vector<64x32xf32> to vector<32xf32>
    %117 = vector.shape_cast %116 : vector<32xf32> to vector<1x32xf32>
    %c0_60 = arith.constant 0 : index
    %c0_61 = arith.constant 0 : index
    %118 = vector.load %arg12[%c0_60, %c0_61] : memref<32x32xf32, #tpu.memory_space<vmem>>, vector<32x32xf32>
    %cst_62 = arith.constant dense<0.000000e+00> : vector<1x32xf32>
    %119 = tpu.matmul %117, %118, %cst_62 {dimension_numbers = #tpu.dot_dimension_numbers<[1], [0], [0], [1], [0, 0, 1, 1], [], []>} : vector<1x32xf32>, vector<32x32xf32>, vector<1x32xf32> -> vector<1x32xf32>
    %cst_63 = arith.constant 9.99999974E-6 : f32
    %120 = vector.broadcast %cst_63 : f32 to vector<1x32xf32>
    %121 = arith.addf %119, %120 : vector<1x32xf32>
    %122 = math.rsqrt %121 : vector<1x32xf32>
    %123 = vector.broadcast %122 : vector<1x32xf32> to vector<64x32xf32>
    %124 = arith.mulf %114, %123 : vector<64x32xf32>
    %c0_64 = arith.constant 0 : index
    %c0_65 = arith.constant 0 : index
    %125 = vector.load %arg10[%c0_64, %c0_65] : memref<1x32xf32, #tpu.memory_space<vmem>>, vector<1x32xf32>
    %126 = vector.broadcast %125 : vector<1x32xf32> to vector<64x32xf32>
    %127 = arith.mulf %124, %126 : vector<64x32xf32>
    %c0_66 = arith.constant 0 : index
    %c0_67 = arith.constant 0 : index
    %128 = vector.load %arg11[%c0_66, %c0_67] : memref<1x32xf32, #tpu.memory_space<vmem>>, vector<1x32xf32>
    %129 = vector.broadcast %128 : vector<1x32xf32> to vector<64x32xf32>
    %130 = arith.addf %127, %129 : vector<64x32xf32>
    %131 = arith.negf %130 : vector<64x32xf32>
    %132 = math.exp %131 : vector<64x32xf32>
    %cst_68 = arith.constant 1.000000e+00 : f32
    %133 = vector.broadcast %cst_68 : f32 to vector<64x32xf32>
    %134 = arith.addf %133, %132 : vector<64x32xf32>
    %135 = arith.divf %133, %134 : vector<64x32xf32>
    %136 = arith.mulf %130, %135 : vector<64x32xf32>
    %cst_69 = arith.constant 0.000000e+00 : f32
    %137 = vector.broadcast %cst_69 : f32 to vector<16x32xf32>
    %c0_70 = arith.constant 0 : index
    %c0_71 = arith.constant 0 : index
    %138 = vector.load %arg17[%c0_70, %c0_71] : memref<96x32xf32, #tpu.memory_space<vmem>>, vector<16x32xf32>
    tpu.vector_store %arg17[%c0_70, %c0_71], %137 {strides = array<i32>} : memref<96x32xf32, #tpu.memory_space<vmem>>, vector<16x32xf32>,
    %cst_72 = arith.constant 0.000000e+00 : f32
    %139 = vector.broadcast %cst_72 : f32 to vector<16x32xf32>
    %c80_73 = arith.constant 80 : index
    %c0_74 = arith.constant 0 : index
    %140 = vector.load %arg17[%c80_73, %c0_74] : memref<96x32xf32, #tpu.memory_space<vmem>>, vector<16x32xf32>
    tpu.vector_store %arg17[%c80_73, %c0_74], %139 {strides = array<i32>} : memref<96x32xf32, #tpu.memory_space<vmem>>, vector<16x32xf32>,
    %c16_75 = arith.constant 16 : index
    %c0_76 = arith.constant 0 : index
    %141 = vector.load %arg17[%c16_75, %c0_76] : memref<96x32xf32, #tpu.memory_space<vmem>>, vector<64x32xf32>
    tpu.vector_store %arg17[%c16_75, %c0_76], %136 {strides = array<i32>} : memref<96x32xf32, #tpu.memory_space<vmem>>, vector<64x32xf32>,
    %c7_77 = arith.constant 7 : index
    %c0_78 = arith.constant 0 : index
    %142 = vector.load %arg17[%c7_77, %c0_78] : memref<96x32xf32, #tpu.memory_space<vmem>>, vector<64x32xf32>
    %cst_79 = arith.constant 0.000000e+00 : f32
    %143 = vector.shape_cast %18 : vector<64x1xi1> to vector<64x1xi1>
    %144 = vector.broadcast %143 : vector<64x1xi1> to vector<64x32xi1>
    %145 = vector.broadcast %cst_79 : f32 to vector<64x32xf32>
    %146 = arith.select %144, %142, %145 : vector<64x32xi1>, vector<64x32xf32>
    %c8_80 = arith.constant 8 : index
    %c0_81 = arith.constant 0 : index
    %147 = vector.load %arg17[%c8_80, %c0_81] : memref<96x32xf32, #tpu.memory_space<vmem>>, vector<64x32xf32>
    %c9_82 = arith.constant 9 : index
    %c0_83 = arith.constant 0 : index
    %148 = vector.load %arg17[%c9_82, %c0_83] : memref<96x32xf32, #tpu.memory_space<vmem>>, vector<64x32xf32>
    %cst_84 = arith.constant 0.000000e+00 : f32
    %149 = vector.shape_cast %20 : vector<64x1xi1> to vector<64x1xi1>
    %150 = vector.broadcast %149 : vector<64x1xi1> to vector<64x32xi1>
    %151 = vector.broadcast %cst_84 : f32 to vector<64x32xf32>
    %152 = arith.select %150, %148, %151 : vector<64x32xi1>, vector<64x32xf32>
    %c15_85 = arith.constant 15 : index
    %c0_86 = arith.constant 0 : index
    %153 = vector.load %arg17[%c15_85, %c0_86] : memref<96x32xf32, #tpu.memory_space<vmem>>, vector<64x32xf32>
    %cst_87 = arith.constant 0.000000e+00 : f32
    %154 = vector.shape_cast %18 : vector<64x1xi1> to vector<64x1xi1>
    %155 = vector.broadcast %154 : vector<64x1xi1> to vector<64x32xi1>
    %156 = vector.broadcast %cst_87 : f32 to vector<64x32xf32>
    %157 = arith.select %155, %153, %156 : vector<64x32xi1>, vector<64x32xf32>
    %c16_88 = arith.constant 16 : index
    %c0_89 = arith.constant 0 : index
    %158 = vector.load %arg17[%c16_88, %c0_89] : memref<96x32xf32, #tpu.memory_space<vmem>>, vector<64x32xf32>
    %c17_90 = arith.constant 17 : index
    %c0_91 = arith.constant 0 : index
    %159 = vector.load %arg17[%c17_90, %c0_91] : memref<96x32xf32, #tpu.memory_space<vmem>>, vector<64x32xf32>
    %cst_92 = arith.constant 0.000000e+00 : f32
    %160 = vector.shape_cast %20 : vector<64x1xi1> to vector<64x1xi1>
    %161 = vector.broadcast %160 : vector<64x1xi1> to vector<64x32xi1>
    %162 = vector.broadcast %cst_92 : f32 to vector<64x32xf32>
    %163 = arith.select %161, %159, %162 : vector<64x32xi1>, vector<64x32xf32>
    %c23_93 = arith.constant 23 : index
    %c0_94 = arith.constant 0 : index
    %164 = vector.load %arg17[%c23_93, %c0_94] : memref<96x32xf32, #tpu.memory_space<vmem>>, vector<64x32xf32>
    %cst_95 = arith.constant 0.000000e+00 : f32
    %165 = vector.shape_cast %18 : vector<64x1xi1> to vector<64x1xi1>
    %166 = vector.broadcast %165 : vector<64x1xi1> to vector<64x32xi1>
    %167 = vector.broadcast %cst_95 : f32 to vector<64x32xf32>
    %168 = arith.select %166, %164, %167 : vector<64x32xi1>, vector<64x32xf32>
    %c24_96 = arith.constant 24 : index
    %c0_97 = arith.constant 0 : index
    %169 = vector.load %arg17[%c24_96, %c0_97] : memref<96x32xf32, #tpu.memory_space<vmem>>, vector<64x32xf32>
    %c25_98 = arith.constant 25 : index
    %c0_99 = arith.constant 0 : index
    %170 = vector.load %arg17[%c25_98, %c0_99] : memref<96x32xf32, #tpu.memory_space<vmem>>, vector<64x32xf32>
    %cst_100 = arith.constant 0.000000e+00 : f32
    %171 = vector.shape_cast %20 : vector<64x1xi1> to vector<64x1xi1>
    %172 = vector.broadcast %171 : vector<64x1xi1> to vector<64x32xi1>
    %173 = vector.broadcast %cst_100 : f32 to vector<64x32xf32>
    %174 = arith.select %172, %170, %173 : vector<64x32xi1>, vector<64x32xf32>
    %175 = tpu.concatenate %146, %147, %152, %157, %158, %163, %168, %169, %174, %23 in 1 : vector<64x32xf32>, vector<64x32xf32>, vector<64x32xf32>, vector<64x32xf32>, vector<64x32xf32>, vector<64x32xf32>, vector<64x32xf32>, vector<64x32xf32>, vector<64x32xf32>, vector<64x16xf32> -> vector<64x304xf32>
    %c0_101 = arith.constant 0 : index
    %c0_102 = arith.constant 0 : index
    %176 = vector.load %arg13[%c0_101, %c0_102] : memref<304x32xf32, #tpu.memory_space<vmem>>, vector<304x32xf32>
    %cst_103 = arith.constant dense<0.000000e+00> : vector<64x32xf32>
    %177 = tpu.matmul %175, %176, %cst_103 {dimension_numbers = #tpu.dot_dimension_numbers<[1], [0], [0], [1], [0, 0, 1, 1], [], []>} : vector<64x304xf32>, vector<304x32xf32>, vector<64x32xf32> -> vector<64x32xf32>
    %c0_104 = arith.constant 0 : index
    %c0_105 = arith.constant 0 : index
    %178 = vector.load %arg14[%c0_104, %c0_105] : memref<1x32xf32, #tpu.memory_space<vmem>>, vector<1x32xf32>
    %179 = vector.broadcast %178 : vector<1x32xf32> to vector<64x32xf32>
    %180 = arith.addf %177, %179 : vector<64x32xf32>
    %181 = tpu.transpose %180, [1, 0] : vector<64x32xf32> -> vector<32x64xf32>
    %c0_106 = arith.constant 0 : index
    %c0_107 = arith.constant 0 : index
    %c0_108 = arith.constant 0 : index
    %182 = vector.load %arg15[%c0_106, %c0_107, %c0_108] : memref<1x32x64xf32, #tpu.memory_space<vmem>>, vector<1x32x64xf32>
    %183 = vector.shape_cast %182 : vector<1x32x64xf32> to vector<32x64xf32>
    %184 = vector.shape_cast %181 : vector<32x64xf32> to vector<1x32x64xf32>
    tpu.vector_store %arg15[%c0_106, %c0_107, %c0_108], %184 {strides = array<i32>} : memref<1x32x64xf32, #tpu.memory_space<vmem>>, vector<1x32x64xf32>,
    return
  }
  func.func @transform_0(%arg0: i32) -> (i32, i32, i32) {
    %c0_i32 = arith.constant 0 : i32
    %c0_i32_0 = arith.constant 0 : i32
    %c0_i32_1 = arith.constant 0 : i32
    return %arg0, %c0_i32, %c0_i32_0 : i32, i32, i32
  }
  func.func @transform_1(%arg0: i32) -> (i32, i32, i32) {
    %c0_i32 = arith.constant 0 : i32
    %c0_i32_0 = arith.constant 0 : i32
    %c0_i32_1 = arith.constant 0 : i32
    return %arg0, %c0_i32, %c0_i32_0 : i32, i32, i32
  }
  func.func @transform_2(%arg0: i32) -> (i32, i32) {
    %c0_i32 = arith.constant 0 : i32
    %c0_i32_0 = arith.constant 0 : i32
    %c0_i32_1 = arith.constant 0 : i32
    return %c0_i32, %c0_i32_0 : i32, i32
  }
  func.func @transform_3(%arg0: i32) -> (i32, i32) {
    %c0_i32 = arith.constant 0 : i32
    %c0_i32_0 = arith.constant 0 : i32
    %c0_i32_1 = arith.constant 0 : i32
    return %c0_i32, %c0_i32_0 : i32, i32
  }
  func.func @transform_4(%arg0: i32) -> (i32, i32) {
    %c0_i32 = arith.constant 0 : i32
    %c0_i32_0 = arith.constant 0 : i32
    %c0_i32_1 = arith.constant 0 : i32
    return %c0_i32, %c0_i32_0 : i32, i32
  }
  func.func @transform_5(%arg0: i32) -> (i32, i32) {
    %c0_i32 = arith.constant 0 : i32
    %c0_i32_0 = arith.constant 0 : i32
    %c0_i32_1 = arith.constant 0 : i32
    return %c0_i32, %c0_i32_0 : i32, i32
  }
  func.func @transform_6(%arg0: i32) -> (i32, i32) {
    %c0_i32 = arith.constant 0 : i32
    %c0_i32_0 = arith.constant 0 : i32
    %c0_i32_1 = arith.constant 0 : i32
    return %c0_i32, %c0_i32_0 : i32, i32
  }
  func.func @transform_7(%arg0: i32) -> (i32, i32) {
    %c0_i32 = arith.constant 0 : i32
    %c0_i32_0 = arith.constant 0 : i32
    %c0_i32_1 = arith.constant 0 : i32
    return %c0_i32, %c0_i32_0 : i32, i32
  }
  func.func @transform_8(%arg0: i32) -> (i32, i32) {
    %c0_i32 = arith.constant 0 : i32
    %c0_i32_0 = arith.constant 0 : i32
    %c0_i32_1 = arith.constant 0 : i32
    return %c0_i32, %c0_i32_0 : i32, i32
  }
  func.func @transform_9(%arg0: i32) -> (i32, i32) {
    %c0_i32 = arith.constant 0 : i32
    %c0_i32_0 = arith.constant 0 : i32
    %c0_i32_1 = arith.constant 0 : i32
    return %c0_i32, %c0_i32_0 : i32, i32
  }
  func.func @transform_10(%arg0: i32) -> (i32, i32) {
    %c0_i32 = arith.constant 0 : i32
    %c0_i32_0 = arith.constant 0 : i32
    %c0_i32_1 = arith.constant 0 : i32
    return %c0_i32, %c0_i32_0 : i32, i32
  }
  func.func @transform_11(%arg0: i32) -> (i32, i32) {
    %c0_i32 = arith.constant 0 : i32
    %c0_i32_0 = arith.constant 0 : i32
    %c0_i32_1 = arith.constant 0 : i32
    return %c0_i32, %c0_i32_0 : i32, i32
  }
  func.func @transform_12(%arg0: i32) -> (i32, i32) {
    %c0_i32 = arith.constant 0 : i32
    %c0_i32_0 = arith.constant 0 : i32
    %c0_i32_1 = arith.constant 0 : i32
    return %c0_i32, %c0_i32_0 : i32, i32
  }
  func.func @transform_13(%arg0: i32) -> (i32, i32) {
    %c0_i32 = arith.constant 0 : i32
    %c0_i32_0 = arith.constant 0 : i32
    %c0_i32_1 = arith.constant 0 : i32
    return %c0_i32, %c0_i32_0 : i32, i32
  }
  func.func @transform_14(%arg0: i32) -> (i32, i32, i32) {
    %c0_i32 = arith.constant 0 : i32
    %c0_i32_0 = arith.constant 0 : i32
    %c0_i32_1 = arith.constant 0 : i32
    return %arg0, %c0_i32, %c0_i32_0 : i32, i32, i32
  }
}

</mosaic_0001>

<llo_original>
// kernel: resnet_block_forward.1
$region0: #{resnet_block_forward.1}
  #allocation0 [shape = 'u32[]', space=smem, size = 0x4, offset = 0x4, fixed_abs, tag = 'smem constant byte address 0x4 - core index']
  #allocation1 [shape = 'u32[72,128]{1,0:T(1,128)}', space=vmem, size = 0x9000, scoped, tag = 'internal scratch']
  #allocation2 [shape = 'f32[96,16]{1,0:T(8,128)}', space=vmem, size = 0xc000, scoped, tag = 'scratch operand']
  #allocation3 [shape = 'f32[96,32]{1,0:T(8,128)}', space=vmem, size = 0xc000, scoped, tag = 'scratch operand']
  %s0 = inlined_call_operand.vmem [shape: f32[2,16,64], index: 0, kind: input, shape index: {}]
  %s1 = inlined_call_operand.vmem [shape: f32[2,1,32], index: 1, kind: input, shape index: {}]
  %s2 = inlined_call_operand.vmem [shape: f32[1,16], index: 2, kind: input, shape index: {}]
  %s3 = inlined_call_operand.vmem [shape: f32[1,16], index: 3, kind: input, shape index: {}]
  %s4 = inlined_call_operand.vmem [shape: f32[16,16], index: 4, kind: input, shape index: {}]
  %s5 = inlined_call_operand.vmem [shape: f32[144,32], index: 5, kind: input, shape index: {}]
  %s6 = inlined_call_operand.vmem [shape: f32[1,32], index: 6, kind: input, shape index: {}]
  %s7 = inlined_call_operand.vmem [shape: f32[32,32], index: 7, kind: input, shape index: {}]
  %s8 = inlined_call_operand.vmem [shape: f32[1,32], index: 8, kind: input, shape index: {}]
  %s9 = inlined_call_operand.vmem [shape: f32[1,32], index: 9, kind: input, shape index: {}]
  %s10 = inlined_call_operand.vmem [shape: f32[1,32], index: 10, kind: input, shape index: {}]
  %s11 = inlined_call_operand.vmem [shape: f32[32,32], index: 11, kind: input, shape index: {}]
  %s12 = inlined_call_operand.vmem [shape: f32[304,32], index: 12, kind: input, shape index: {}]
  %s13 = inlined_call_operand.vmem [shape: f32[1,32], index: 13, kind: input, shape index: {}]
  %s14 = inlined_call_operand.vmem [shape: f32[2,32,64], index: 14, kind: output, shape index: {}]
  %s15 = sld [smem:[#allocation0]]
  $region89: #{resnet_block_forward.1} parent=0
    _
  %s17 = ssub.s32 1, %s15
  %s18 = scalar_select 0, %s17, %s15
  loop: start=0, step=1, limit=4
  $region2: #{resnet_block_forward.1} parent=0 // loop_pre_header
    _
  $region3: #{resnet_block_forward.1} parent=0 // loop_header
    %s20 = sphi 0, %s24
    %p21 = scmp.ge.s32.totalorder %s20, 4
    %s30 = sphi 0, %s32
    %s33 = sphi 0, %s30
    %s34 = sphi 0, %s33
    %s50 = sphi 0, %s34
    %s56 = sphi 0, %s58
    %s59 = sphi 0, %s56
    %s60 = sphi 0, %s59
    %s76 = sphi 0, %s60
    %s80 = sphi 0, %s80
    %s82 = sphi 0, %s80
    %s83 = sphi 0, %s82
    %s97 = sphi 0, %s83
    %s101 = sphi 0, %s101
    %s103 = sphi 0, %s101
    %s104 = sphi 0, %s103
    %s118 = sphi 0, %s104
    %s122 = sphi 0, %s122
    %s124 = sphi 0, %s122
    %s125 = sphi 0, %s124
    %s139 = sphi 0, %s125
    %s143 = sphi 0, %s143
    %s145 = sphi 0, %s143
    %s146 = sphi 0, %s145
    %s160 = sphi 0, %s146
    %s164 = sphi 0, %s164
    %s166 = sphi 0, %s164
    %s167 = sphi 0, %s166
    %s181 = sphi 0, %s167
    %s185 = sphi 0, %s185
    %s187 = sphi 0, %s185
    %s188 = sphi 0, %s187
    %s202 = sphi 0, %s188
    %s206 = sphi 0, %s206
    %s208 = sphi 0, %s206
    %s209 = sphi 0, %s208
    %s223 = sphi 0, %s209
    %s227 = sphi 0, %s227
    %s229 = sphi 0, %s227
    %s230 = sphi 0, %s229
    %s244 = sphi 0, %s230
    %s248 = sphi 0, %s248
    %s250 = sphi 0, %s248
    %s251 = sphi 0, %s250
    %s265 = sphi 0, %s251
    %s269 = sphi 0, %s269
    %s271 = sphi 0, %s269
    %s272 = sphi 0, %s271
    %s286 = sphi 0, %s272
    %s290 = sphi 0, %s290
    %s292 = sphi 0, %s290
    %s293 = sphi 0, %s292
    %s307 = sphi 0, %s293
    %s311 = sphi 0, %s311
    %s313 = sphi 0, %s311
    %s314 = sphi 0, %s313
    %s328 = sphi 0, %s314
    %s334 = sphi 0, %s336
    %s337 = sphi 0, %s334
    %s338 = sphi 0, %s337
    %s354 = sphi 0, %s338
  $region4: #{resnet_block_forward.1} parent=0 // loop_header_branch
    %23 = sbr.rel (%p21) target = $region8
  $region5: #{resnet_block_forward.1} parent=0 // loop_body
    %s25 = ssub.s32 %s20, 1
    %s26 = ssub.s32 %s20, 2
    %s27 = sadd.s32 %s20, 1
    %s28 = ssub.s32 %s20, %s27
    %p29 = scmp.eq.s32.totalorder %s28, 0
    %s31 = sadd.s32 %s30, 1
    %s32 = scalar_select %p29, %s30, %s31
    %p35 = pneg %p29
    %p36 = scmp.eq.s32.totalorder %s20, 1
    %p37 = por %p35, %p36
    %p38 = scmp.ne.s32.totalorder %s30, %s33
    %p39 = scmp.eq.s32.totalorder %s20, 0
    %p40 = por %p38, %p39
    %p41 = scmp.ne.s32.totalorder %s30, %s33
    %p42 = scmp.eq.s32.totalorder %s25, 1
    %p43 = por %p41, %p42
    %p44 = scmp.ne.s32.totalorder %s33, %s34
    %p45 = scmp.eq.s32.totalorder %s25, 0
    %p46 = por %p44, %p45
    %p47 = scmp.ne.s32.totalorder %s33, %s34
    %p48 = scmp.eq.s32.totalorder %s26, 1
    %p49 = por %p47, %p48
    %p51 = scmp.ne.s32.totalorder %s34, %s50
    %p52 = scmp.eq.s32.totalorder %s26, 0
    %p53 = por %p51, %p52
    %s54 = ssub.s32 %s20, %s27
    %p55 = scmp.eq.s32.totalorder %s54, 0
    %s57 = sadd.s32 %s56, 1
    %s58 = scalar_select %p55, %s56, %s57
    %p61 = pneg %p55
    %p62 = scmp.eq.s32.totalorder %s20, 1
    %p63 = por %p61, %p62
    %p64 = scmp.ne.s32.totalorder %s56, %s59
    %p65 = scmp.eq.s32.totalorder %s20, 0
    %p66 = por %p64, %p65
    %p67 = scmp.ne.s32.totalorder %s56, %s59
    %p68 = scmp.eq.s32.totalorder %s25, 1
    %p69 = por %p67, %p68
    %p70 = scmp.ne.s32.totalorder %s59, %s60
    %p71 = scmp.eq.s32.totalorder %s25, 0
    %p72 = por %p70, %p71
    %p73 = scmp.ne.s32.totalorder %s59, %s60
    %p74 = scmp.eq.s32.totalorder %s26, 1
    %p75 = por %p73, %p74
    %p77 = scmp.ne.s32.totalorder %s60, %s76
    %p78 = scmp.eq.s32.totalorder %s26, 0
    %p79 = por %p77, %p78
    %s81 = sadd.s32 %s80, 1
    %p84 = scmp.eq.s32.totalorder %s20, 1
    %p85 = scmp.ne.s32.totalorder %s80, %s82
    %p86 = scmp.eq.s32.totalorder %s20, 0
    %p87 = por %p85, %p86
    %p88 = scmp.ne.s32.totalorder %s80, %s82
    %p89 = scmp.eq.s32.totalorder %s25, 1
    %p90 = por %p88, %p89
    %p91 = scmp.ne.s32.totalorder %s82, %s83
    %p92 = scmp.eq.s32.totalorder %s25, 0
    %p93 = por %p91, %p92
    %p94 = scmp.ne.s32.totalorder %s82, %s83
    %p95 = scmp.eq.s32.totalorder %s26, 1
    %p96 = por %p94, %p95
    %p98 = scmp.ne.s32.totalorder %s83, %s97
    %p99 = scmp.eq.s32.totalorder %s26, 0
    %p100 = por %p98, %p99
    %s102 = sadd.s32 %s101, 1
    %p105 = scmp.eq.s32.totalorder %s20, 1
    %p106 = scmp.ne.s32.totalorder %s101, %s103
    %p107 = scmp.eq.s32.totalorder %s20, 0
    %p108 = por %p106, %p107
    %p109 = scmp.ne.s32.totalorder %s101, %s103
    %p110 = scmp.eq.s32.totalorder %s25, 1
    %p111 = por %p109, %p110
    %p112 = scmp.ne.s32.totalorder %s103, %s104
    %p113 = scmp.eq.s32.totalorder %s25, 0
    %p114 = por %p112, %p113
    %p115 = scmp.ne.s32.totalorder %s103, %s104
    %p116 = scmp.eq.s32.totalorder %s26, 1
    %p117 = por %p115, %p116
    %p119 = scmp.ne.s32.totalorder %s104, %s118
    %p120 = scmp.eq.s32.totalorder %s26, 0
    %p121 = por %p119, %p120
    %s123 = sadd.s32 %s122, 1
    %p126 = scmp.eq.s32.totalorder %s20, 1
    %p127 = scmp.ne.s32.totalorder %s122, %s124
    %p128 = scmp.eq.s32.totalorder %s20, 0
    %p129 = por %p127, %p128
    %p130 = scmp.ne.s32.totalorder %s122, %s124
    %p131 = scmp.eq.s32.totalorder %s25, 1
    %p132 = por %p130, %p131
    %p133 = scmp.ne.s32.totalorder %s124, %s125
    %p134 = scmp.eq.s32.totalorder %s25, 0
    %p135 = por %p133, %p134
    %p136 = scmp.ne.s32.totalorder %s124, %s125
    %p137 = scmp.eq.s32.totalorder %s26, 1
    %p138 = por %p136, %p137
    %p140 = scmp.ne.s32.totalorder %s125, %s139
    %p141 = scmp.eq.s32.totalorder %s26, 0
    %p142 = por %p140, %p141
    %s144 = sadd.s32 %s143, 1
    %p147 = scmp.eq.s32.totalorder %s20, 1
    %p148 = scmp.ne.s32.totalorder %s143, %s145
    %p149 = scmp.eq.s32.totalorder %s20, 0
    %p150 = por %p148, %p149
    %p151 = scmp.ne.s32.totalorder %s143, %s145
    %p152 = scmp.eq.s32.totalorder %s25, 1
    %p153 = por %p151, %p152
    %p154 = scmp.ne.s32.totalorder %s145, %s146
    %p155 = scmp.eq.s32.totalorder %s25, 0
    %p156 = por %p154, %p155
    %p157 = scmp.ne.s32.totalorder %s145, %s146
    %p158 = scmp.eq.s32.totalorder %s26, 1
    %p159 = por %p157, %p158
    %p161 = scmp.ne.s32.totalorder %s146, %s160
    %p162 = scmp.eq.s32.totalorder %s26, 0
    %p163 = por %p161, %p162
    %s165 = sadd.s32 %s164, 1
    %p168 = scmp.eq.s32.totalorder %s20, 1
    %p169 = scmp.ne.s32.totalorder %s164, %s166
    %p170 = scmp.eq.s32.totalorder %s20, 0
    %p171 = por %p169, %p170
    %p172 = scmp.ne.s32.totalorder %s164, %s166
    %p173 = scmp.eq.s32.totalorder %s25, 1
    %p174 = por %p172, %p173
    %p175 = scmp.ne.s32.totalorder %s166, %s167
    %p176 = scmp.eq.s32.totalorder %s25, 0
    %p177 = por %p175, %p176
    %p178 = scmp.ne.s32.totalorder %s166, %s167
    %p179 = scmp.eq.s32.totalorder %s26, 1
    %p180 = por %p178, %p179
    %p182 = scmp.ne.s32.totalorder %s167, %s181
    %p183 = scmp.eq.s32.totalorder %s26, 0
    %p184 = por %p182, %p183
    %s186 = sadd.s32 %s185, 1
    %p189 = scmp.eq.s32.totalorder %s20, 1
    %p190 = scmp.ne.s32.totalorder %s185, %s187
    %p191 = scmp.eq.s32.totalorder %s20, 0
    %p192 = por %p190, %p191
    %p193 = scmp.ne.s32.totalorder %s185, %s187
    %p194 = scmp.eq.s32.totalorder %s25, 1
    %p195 = por %p193, %p194
    %p196 = scmp.ne.s32.totalorder %s187, %s188
    %p197 = scmp.eq.s32.totalorder %s25, 0
    %p198 = por %p196, %p197
    %p199 = scmp.ne.s32.totalorder %s187, %s188
    %p200 = scmp.eq.s32.totalorder %s26, 1
    %p201 = por %p199, %p200
    %p203 = scmp.ne.s32.totalorder %s188, %s202
    %p204 = scmp.eq.s32.totalorder %s26, 0
    %p205 = por %p203, %p204
    %s207 = sadd.s32 %s206, 1
    %p210 = scmp.eq.s32.totalorder %s20, 1
    %p211 = scmp.ne.s32.totalorder %s206, %s208
    %p212 = scmp.eq.s32.totalorder %s20, 0
    %p213 = por %p211, %p212
    %p214 = scmp.ne.s32.totalorder %s206, %s208
    %p215 = scmp.eq.s32.totalorder %s25, 1
    %p216 = por %p214, %p215
    %p217 = scmp.ne.s32.totalorder %s208, %s209
    %p218 = scmp.eq.s32.totalorder %s25, 0
    %p219 = por %p217, %p218
    %p220 = scmp.ne.s32.totalorder %s208, %s209
    %p221 = scmp.eq.s32.totalorder %s26, 1
    %p222 = por %p220, %p221
    %p224 = scmp.ne.s32.totalorder %s209, %s223
    %p225 = scmp.eq.s32.totalorder %s26, 0
    %p226 = por %p224, %p225
    %s228 = sadd.s32 %s227, 1
    %p231 = scmp.eq.s32.totalorder %s20, 1
    %p232 = scmp.ne.s32.totalorder %s227, %s229
    %p233 = scmp.eq.s32.totalorder %s20, 0
    %p234 = por %p232, %p233
    %p235 = scmp.ne.s32.totalorder %s227, %s229
    %p236 = scmp.eq.s32.totalorder %s25, 1
    %p237 = por %p235, %p236
    %p238 = scmp.ne.s32.totalorder %s229, %s230
    %p239 = scmp.eq.s32.totalorder %s25, 0
    %p240 = por %p238, %p239
    %p241 = scmp.ne.s32.totalorder %s229, %s230
    %p242 = scmp.eq.s32.totalorder %s26, 1
    %p243 = por %p241, %p242
    %p245 = scmp.ne.s32.totalorder %s230, %s244
    %p246 = scmp.eq.s32.totalorder %s26, 0
    %p247 = por %p245, %p246
    %s249 = sadd.s32 %s248, 1
    %p252 = scmp.eq.s32.totalorder %s20, 1
    %p253 = scmp.ne.s32.totalorder %s248, %s250
    %p254 = scmp.eq.s32.totalorder %s20, 0
    %p255 = por %p253, %p254
    %p256 = scmp.ne.s32.totalorder %s248, %s250
    %p257 = scmp.eq.s32.totalorder %s25, 1
    %p258 = por %p256, %p257
    %p259 = scmp.ne.s32.totalorder %s250, %s251
    %p260 = scmp.eq.s32.totalorder %s25, 0
    %p261 = por %p259, %p260
    %p262 = scmp.ne.s32.totalorder %s250, %s251
    %p263 = scmp.eq.s32.totalorder %s26, 1
    %p264 = por %p262, %p263
    %p266 = scmp.ne.s32.totalorder %s251, %s265
    %p267 = scmp.eq.s32.totalorder %s26, 0
    %p268 = por %p266, %p267
    %s270 = sadd.s32 %s269, 1
    %p273 = scmp.eq.s32.totalorder %s20, 1
    %p274 = scmp.ne.s32.totalorder %s269, %s271
    %p275 = scmp.eq.s32.totalorder %s20, 0
    %p276 = por %p274, %p275
    %p277 = scmp.ne.s32.totalorder %s269, %s271
    %p278 = scmp.eq.s32.totalorder %s25, 1
    %p279 = por %p277, %p278
    %p280 = scmp.ne.s32.totalorder %s271, %s272
    %p281 = scmp.eq.s32.totalorder %s25, 0
    %p282 = por %p280, %p281
    %p283 = scmp.ne.s32.totalorder %s271, %s272
    %p284 = scmp.eq.s32.totalorder %s26, 1
    %p285 = por %p283, %p284
    %p287 = scmp.ne.s32.totalorder %s272, %s286
    %p288 = scmp.eq.s32.totalorder %s26, 0
    %p289 = por %p287, %p288
    %s291 = sadd.s32 %s290, 1
    %p294 = scmp.eq.s32.totalorder %s20, 1
    %p295 = scmp.ne.s32.totalorder %s290, %s292
    %p296 = scmp.eq.s32.totalorder %s20, 0
    %p297 = por %p295, %p296
    %p298 = scmp.ne.s32.totalorder %s290, %s292
    %p299 = scmp.eq.s32.totalorder %s25, 1
    %p300 = por %p298, %p299
    %p301 = scmp.ne.s32.totalorder %s292, %s293
    %p302 = scmp.eq.s32.totalorder %s25, 0
    %p303 = por %p301, %p302
    %p304 = scmp.ne.s32.totalorder %s292, %s293
    %p305 = scmp.eq.s32.totalorder %s26, 1
    %p306 = por %p304, %p305
    %p308 = scmp.ne.s32.totalorder %s293, %s307
    %p309 = scmp.eq.s32.totalorder %s26, 0
    %p310 = por %p308, %p309
    %s312 = sadd.s32 %s311, 1
    %p315 = scmp.eq.s32.totalorder %s20, 1
    %p316 = scmp.ne.s32.totalorder %s311, %s313
    %p317 = scmp.eq.s32.totalorder %s20, 0
    %p318 = por %p316, %p317
    %p319 = scmp.ne.s32.totalorder %s311, %s313
    %p320 = scmp.eq.s32.totalorder %s25, 1
    %p321 = por %p319, %p320
    %p322 = scmp.ne.s32.totalorder %s313, %s314
    %p323 = scmp.eq.s32.totalorder %s25, 0
    %p324 = por %p322, %p323
    %p325 = scmp.ne.s32.totalorder %s313, %s314
    %p326 = scmp.eq.s32.totalorder %s26, 1
    %p327 = por %p325, %p326
    %p329 = scmp.ne.s32.totalorder %s314, %s328
    %p330 = scmp.eq.s32.totalorder %s26, 0
    %p331 = por %p329, %p330
    %s332 = ssub.s32 %s20, %s27
    %p333 = scmp.eq.s32.totalorder %s332, 0
    %s335 = sadd.s32 %s334, 1
    %s336 = scalar_select %p333, %s334, %s335
    %p339 = pneg %p333
    %p340 = scmp.eq.s32.totalorder %s20, 1
    %p341 = por %p339, %p340
    %p342 = scmp.ne.s32.totalorder %s334, %s337
    %p343 = scmp.eq.s32.totalorder %s20, 0
    %p344 = por %p342, %p343
    %p345 = scmp.ne.s32.totalorder %s334, %s337
    %p346 = scmp.eq.s32.totalorder %s25, 1
    %p347 = por %p345, %p346
    %p348 = scmp.ne.s32.totalorder %s337, %s338
    %p349 = scmp.eq.s32.totalorder %s25, 0
    %p350 = por %p348, %p349
    %p351 = scmp.ne.s32.totalorder %s337, %s338
    %p352 = scmp.eq.s32.totalorder %s26, 1
    %p353 = por %p351, %p352
    %p355 = scmp.ne.s32.totalorder %s338, %s354
    %p356 = scmp.eq.s32.totalorder %s26, 0
    %p357 = por %p355, %p356
    %p358 = scmp.le.s32.totalorder 1, %s20
    %p359 = scmp.lt.s32.totalorder %s20, 3
    %p360 = pnand %p358, %p359
    %p361 = pneg %p360
    // Predicated region
    $region9: #{resnet_block_forward.1} parent=5 // pred_check
      _
    $region10: #{resnet_block_forward.1} parent=5 // pred_check_branch
      %363 = sbr.rel (%p360) target = $region12
    $region11: #{resnet_block_forward.1} parent=5 // pred_region
      %s364 = ssub.s32 %s20, 1
      // Predicated region
      $region13: #{resnet_block_forward.1} parent=11 // pred_check
        %p365 = pneg %p93
      $region14: #{resnet_block_forward.1} parent=11 // pred_check_branch
        %367 = sbr.rel (%p365) target = $region16
      $region15: #{resnet_block_forward.1} parent=11 // pred_region
        _
      $region16: #{resnet_block_forward.1} parent=11 // pred_fallthru
        _
      // Predicated region
      $region17: #{resnet_block_forward.1} parent=11 // pred_check
        %p368 = pneg %p114
      $region18: #{resnet_block_forward.1} parent=11 // pred_check_branch
        %370 = sbr.rel (%p368) target = $region20
      $region19: #{resnet_block_forward.1} parent=11 // pred_region
        _
      $region20: #{resnet_block_forward.1} parent=11 // pred_fallthru
        _
      // Predicated region
      $region21: #{resnet_block_forward.1} parent=11 // pred_check
        %p371 = pneg %p135
      $region22: #{resnet_block_forward.1} parent=11 // pred_check_branch
        %373 = sbr.rel (%p371) target = $region24
      $region23: #{resnet_block_forward.1} parent=11 // pred_region
        _
      $region24: #{resnet_block_forward.1} parent=11 // pred_fallthru
        _
      // Predicated region
      $region25: #{resnet_block_forward.1} parent=11 // pred_check
        %p374 = pneg %p156
      $region26: #{resnet_block_forward.1} parent=11 // pred_check_branch
        %376 = sbr.rel (%p374) target = $region28
      $region27: #{resnet_block_forward.1} parent=11 // pred_region
        _
      $region28: #{resnet_block_forward.1} parent=11 // pred_fallthru
        _
      // Predicated region
      $region29: #{resnet_block_forward.1} parent=11 // pred_check
        %p377 = pneg %p177
      $region30: #{resnet_block_forward.1} parent=11 // pred_check_branch
        %379 = sbr.rel (%p377) target = $region32
      $region31: #{resnet_block_forward.1} parent=11 // pred_region
        _
      $region32: #{resnet_block_forward.1} parent=11 // pred_fallthru
        _
      // Predicated region
      $region33: #{resnet_block_forward.1} parent=11 // pred_check
        %p380 = pneg %p198
      $region34: #{resnet_block_forward.1} parent=11 // pred_check_branch
        %382 = sbr.rel (%p380) target = $region36
      $region35: #{resnet_block_forward.1} parent=11 // pred_region
        _
      $region36: #{resnet_block_forward.1} parent=11 // pred_fallthru
        _
      // Predicated region
      $region37: #{resnet_block_forward.1} parent=11 // pred_check
        %p383 = pneg %p219
      $region38: #{resnet_block_forward.1} parent=11 // pred_check_branch
        %385 = sbr.rel (%p383) target = $region40
      $region39: #{resnet_block_forward.1} parent=11 // pred_region
        _
      $region40: #{resnet_block_forward.1} parent=11 // pred_fallthru
        _
      // Predicated region
      $region41: #{resnet_block_forward.1} parent=11 // pred_check
        %p386 = pneg %p240
      $region42: #{resnet_block_forward.1} parent=11 // pred_check_branch
        %388 = sbr.rel (%p386) target = $region44
      $region43: #{resnet_block_forward.1} parent=11 // pred_region
        _
      $region44: #{resnet_block_forward.1} parent=11 // pred_fallthru
        _
      // Predicated region
      $region45: #{resnet_block_forward.1} parent=11 // pred_check
        %p389 = pneg %p261
      $region46: #{resnet_block_forward.1} parent=11 // pred_check_branch
        %391 = sbr.rel (%p389) target = $region48
      $region47: #{resnet_block_forward.1} parent=11 // pred_region
        _
      $region48: #{resnet_block_forward.1} parent=11 // pred_fallthru
        _
      // Predicated region
      $region49: #{resnet_block_forward.1} parent=11 // pred_check
        %p392 = pneg %p282
      $region50: #{resnet_block_forward.1} parent=11 // pred_check_branch
        %394 = sbr.rel (%p392) target = $region52
      $region51: #{resnet_block_forward.1} parent=11 // pred_region
        _
      $region52: #{resnet_block_forward.1} parent=11 // pred_fallthru
        _
      // Predicated region
      $region53: #{resnet_block_forward.1} parent=11 // pred_check
        %p395 = pneg %p303
      $region54: #{resnet_block_forward.1} parent=11 // pred_check_branch
        %397 = sbr.rel (%p395) target = $region56
      $region55: #{resnet_block_forward.1} parent=11 // pred_region
        _
      $region56: #{resnet_block_forward.1} parent=11 // pred_fallthru
        _
      // Predicated region
      $region57: #{resnet_block_forward.1} parent=11 // pred_check
        %p398 = pneg %p324
      $region58: #{resnet_block_forward.1} parent=11 // pred_check_branch
        %400 = sbr.rel (%p398) target = $region60
      $region59: #{resnet_block_forward.1} parent=11 // pred_region
        _
      $region60: #{resnet_block_forward.1} parent=11 // pred_fallthru
        _
    $region12: #{resnet_block_forward.1} parent=5 // pred_fallthru
      _
    %p401 = scmp.lt.s32.totalorder %s20, 2
    // Predicated region
    $region61: #{resnet_block_forward.1} parent=5 // pred_check
      %p402 = pneg %p401
    $region62: #{resnet_block_forward.1} parent=5 // pred_check_branch
      %404 = sbr.rel (%p402) target = $region64
    $region63: #{resnet_block_forward.1} parent=5 // pred_region
      // Predicated region
      $region65: #{resnet_block_forward.1} parent=63 // pred_check
        %p405 = pneg %p40
      $region66: #{resnet_block_forward.1} parent=63 // pred_check_branch
        %407 = sbr.rel (%p405) target = $region68
      $region67: #{resnet_block_forward.1} parent=63 // pred_region
        %p408 = scmp.lt.s32.totalorder %s20, 1
        %s409 = scalar_select %p408, %s20, 1
        %s410 = smul.addr %s409, 2
        %s411 = smul.addr %s410, 8
        %s412 = scalar_lea.vmem %s0, %s411
      $region68: #{resnet_block_forward.1} parent=63 // pred_fallthru
        _
      // Predicated region
      $region69: #{resnet_block_forward.1} parent=63 // pred_check
        %p413 = pneg %p66
      $region70: #{resnet_block_forward.1} parent=63 // pred_check_branch
        %415 = sbr.rel (%p413) target = $region72
      $region71: #{resnet_block_forward.1} parent=63 // pred_region
        %p416 = scmp.lt.s32.totalorder %s20, 1
        %s417 = scalar_select %p416, %s20, 1
        %s418 = scalar_lea.vmem %s1, %s417
      $region72: #{resnet_block_forward.1} parent=63 // pred_fallthru
        _
    $region64: #{resnet_block_forward.1} parent=5 // pred_fallthru
      _
    %p419 = scmp.le.s32.totalorder 1, %s20
    %p420 = scmp.lt.s32.totalorder %s20, 3
    %p421 = pnand %p419, %p420
    %p422 = pneg %p421
    // Predicated region
    $region73: #{resnet_block_forward.1} parent=5 // pred_check
      _
    $region74: #{resnet_block_forward.1} parent=5 // pred_check_branch
      %424 = sbr.rel (%p421) target = $region76
    $region75: #{resnet_block_forward.1} parent=5 // pred_region
      %s425 = ssub.s32 %s20, 1
      %p426 = scmp.lt.s32.totalorder %s25, 1
      %s427 = scalar_select %p426, %s25, 1
      %s428 = smul.addr %s427, 2
      %s429 = smul.addr %s428, 8
      %s430 = scalar_lea.vmem %s0, %s429
      %p431 = pneg %p46
      %p432 = pneg %p43
      %p433 = scmp.lt.s32.totalorder %s25, 1
      %s434 = scalar_select %p433, %s25, 1
      %s435 = scalar_lea.vmem %s1, %s434
      %p436 = pneg %p72
      %p437 = pneg %p69
      %p438 = pneg %p93
      %p439 = pneg %p90
      %p440 = pneg %p114
      %p441 = pneg %p111
      %p442 = pneg %p135
      %p443 = pneg %p132
      %p444 = pneg %p156
      %p445 = pneg %p153
      %p446 = pneg %p177
      %p447 = pneg %p174
      %p448 = pneg %p198
      %p449 = pneg %p195
      %p450 = pneg %p219
      %p451 = pneg %p216
      %p452 = pneg %p240
      %p453 = pneg %p237
      %p454 = pneg %p261
      %p455 = pneg %p258
      %p456 = pneg %p282
      %p457 = pneg %p279
      %p458 = pneg %p303
      %p459 = pneg %p300
      %p460 = pneg %p324
      %p461 = pneg %p321
      %p462 = pneg %p350
      %p463 = pneg %p347
      %p464 = scmp.lt.s32.totalorder %s25, 1
      %s465 = scalar_select %p464, %s25, 1
      %s466 = smul.addr %s465, 4
      %s467 = smul.addr %s466, 8
      %s468 = scalar_lea.vmem %s14, %s467
      %p469 = scmp.lt.s32.totalorder %s25, 1
      %s470 = scalar_select %p469, %s25, 1
      %s471 = smul.addr %s470, 2
      %s472 = smul.addr %s471, 8
      %s473 = scalar_lea.vmem %s0, %s472
      %p474 = scmp.lt.s32.totalorder %s25, 1
      %s475 = scalar_select %p474, %s25, 1
      %s476 = scalar_lea.vmem %s1, %s475
      %p477 = scmp.lt.s32.totalorder %s25, 1
      %s478 = scalar_select %p477, %s25, 1
      %s479 = smul.addr %s478, 4
      %s480 = smul.addr %s479, 8
      %s481 = scalar_lea.vmem %s14, %s480
      %v482 = vlaneseq
      %v483 = vshrl.u32 %v482, 7
      %v484 = vadd.s32 %v483, 8
      %v485 = vadd.s32 %v483, 16
      %v486 = vadd.s32 %v483, 24
      %v487 = vadd.s32 %v483, 32
      %v488 = vadd.s32 %v483, 40
      %v489 = vadd.s32 %v483, 48
      %v490 = vadd.s32 %v483, 56
      %vm491 = vcmp.lt.s32.totalorder %v483, 0
      %v492 = vsub.s32 0, %v483
      %v493 = vsel %vm491, %v492, %v483
      %v494 = vshrl.u32 %v493, 3
      %v495 = vand.u32 %v493, 7
      %v496 = vsub.s32 0, %v495
      %v497 = vsel %vm491, %v496, %v495
      %vm498 = vcmp.lt.s32.totalorder %v484, 0
      %v499 = vsub.s32 0, %v484
      %v500 = vsel %vm498, %v499, %v484
      %v501 = vshrl.u32 %v500, 3
      %v502 = vand.u32 %v500, 7
      %v503 = vsub.s32 0, %v502
      %v504 = vsel %vm498, %v503, %v502
      %vm505 = vcmp.lt.s32.totalorder %v485, 0
      %v506 = vsub.s32 0, %v485
      %v507 = vsel %vm505, %v506, %v485
      %v508 = vshrl.u32 %v507, 3
      %v509 = vand.u32 %v507, 7
      %v510 = vsub.s32 0, %v509
      %v511 = vsel %vm505, %v510, %v509
      %vm512 = vcmp.lt.s32.totalorder %v486, 0
      %v513 = vsub.s32 0, %v486
      %v514 = vsel %vm512, %v513, %v486
      %v515 = vshrl.u32 %v514, 3
      %v516 = vand.u32 %v514, 7
      %v517 = vsub.s32 0, %v516
      %v518 = vsel %vm512, %v517, %v516
      %vm519 = vcmp.lt.s32.totalorder %v487, 0
      %v520 = vsub.s32 0, %v487
      %v521 = vsel %vm519, %v520, %v487
      %v522 = vshrl.u32 %v521, 3
      %v523 = vand.u32 %v521, 7
      %v524 = vsub.s32 0, %v523
      %v525 = vsel %vm519, %v524, %v523
      %vm526 = vcmp.lt.s32.totalorder %v488, 0
      %v527 = vsub.s32 0, %v488
      %v528 = vsel %vm526, %v527, %v488
      %v529 = vshrl.u32 %v528, 3
      %v530 = vand.u32 %v528, 7
      %v531 = vsub.s32 0, %v530
      %v532 = vsel %vm526, %v531, %v530
      %vm533 = vcmp.lt.s32.totalorder %v489, 0
      %v534 = vsub.s32 0, %v489
      %v535 = vsel %vm533, %v534, %v489
      %v536 = vshrl.u32 %v535, 3
      %v537 = vand.u32 %v535, 7
      %v538 = vsub.s32 0, %v537
      %v539 = vsel %vm533, %v538, %v537
      %vm540 = vcmp.lt.s32.totalorder %v490, 0
      %v541 = vsub.s32 0, %v490
      %v542 = vsel %vm540, %v541, %v490
      %v543 = vshrl.u32 %v542, 3
      %v544 = vand.u32 %v542, 7
      %v545 = vsub.s32 0, %v544
      %v546 = vsel %vm540, %v545, %v544
      %vm547 = vcmp.ne.s32.totalorder %v497, 0
      %vm548 = vcmp.ne.s32.totalorder %v504, 0
      %vm549 = vcmp.ne.s32.totalorder %v511, 0
      %vm550 = vcmp.ne.s32.totalorder %v518, 0
      %vm551 = vcmp.ne.s32.totalorder %v525, 0
      %vm552 = vcmp.ne.s32.totalorder %v532, 0
      %vm553 = vcmp.ne.s32.totalorder %v539, 0
      %vm554 = vcmp.ne.s32.totalorder %v546, 0
      %vm555 = vcmp.lt.s32.totalorder %v497, 0
      %vm556 = vcmp.lt.s32.totalorder %v504, 0
      %vm557 = vcmp.lt.s32.totalorder %v511, 0
      %vm558 = vcmp.lt.s32.totalorder %v518, 0
      %vm559 = vcmp.lt.s32.totalorder %v525, 0
      %vm560 = vcmp.lt.s32.totalorder %v532, 0
      %vm561 = vcmp.lt.s32.totalorder %v539, 0
      %vm562 = vcmp.lt.s32.totalorder %v546, 0
      %vm563 = vmand %vm555, %vm547
      %vm564 = vmand %vm556, %vm548
      %vm565 = vmand %vm557, %vm549
      %vm566 = vmand %vm558, %vm550
      %vm567 = vmand %vm559, %vm551
      %vm568 = vmand %vm560, %vm552
      %vm569 = vmand %vm561, %vm553
      %vm570 = vmand %vm562, %vm554
      %v571 = vadd.s32 %v497, 8
      %v572 = vadd.s32 %v504, 8
      %v573 = vadd.s32 %v511, 8
      %v574 = vadd.s32 %v518, 8
      %v575 = vadd.s32 %v525, 8
      %v576 = vadd.s32 %v532, 8
      %v577 = vadd.s32 %v539, 8
      %v578 = vadd.s32 %v546, 8
      %v579 = vsel %vm563, %v571, %v497
      %v580 = vsel %vm564, %v572, %v504
      %v581 = vsel %vm565, %v573, %v511
      %v582 = vsel %vm566, %v574, %v518
      %v583 = vsel %vm567, %v575, %v525
      %v584 = vsel %vm568, %v576, %v532
      %v585 = vsel %vm569, %v577, %v539
      %v586 = vsel %vm570, %v578, %v546
      %vm587 = vcmp.ne.s32.totalorder %v579, 0
      %vm588 = vcmp.ne.s32.totalorder %v580, 0
      %vm589 = vcmp.ne.s32.totalorder %v581, 0
      %vm590 = vcmp.ne.s32.totalorder %v582, 0
      %vm591 = vcmp.ne.s32.totalorder %v583, 0
      %vm592 = vcmp.ne.s32.totalorder %v584, 0
      %vm593 = vcmp.ne.s32.totalorder %v585, 0
      %vm594 = vcmp.ne.s32.totalorder %v586, 0
      %vm595 = vcmp.ne.s32.totalorder %v579, 7
      %vm596 = vcmp.ne.s32.totalorder %v580, 7
      %vm597 = vcmp.ne.s32.totalorder %v581, 7
      %vm598 = vcmp.ne.s32.totalorder %v582, 7
      %vm599 = vcmp.ne.s32.totalorder %v583, 7
      %vm600 = vcmp.ne.s32.totalorder %v584, 7
      %vm601 = vcmp.ne.s32.totalorder %v585, 7
      %vm602 = vcmp.ne.s32.totalorder %v586, 7
      %v603 = vld [vmem:[%s473] sm:$0xff]
      %v604 = vld [vmem:[%s473 + $0x8] sm:$0xff]
      %605 = vxpose.xlu0.b32.start [1/16] %v603, 128
      %606 = vxpose.xlu0.b32.cont [2/16] %v604, 128
      %607 = vxpose.xlu0.b32.cont [3/16] 0.0, 128
      %608 = vxpose.xlu0.b32.cont [4/16] 0.0, 128
      %609 = vxpose.xlu0.b32.cont [5/16] 0.0, 128
      %610 = vxpose.xlu0.b32.cont [6/16] 0.0, 128
      %611 = vxpose.xlu0.b32.cont [7/16] 0.0, 128
      %612 = vxpose.xlu0.b32.cont [8/16] 0.0, 128
      %613 = vxpose.xlu0.b32.cont [9/16] 0.0, 128
      %614 = vxpose.xlu0.b32.cont [10/16] 0.0, 128
      %615 = vxpose.xlu0.b32.cont [11/16] 0.0, 128
      %616 = vxpose.xlu0.b32.cont [12/16] 0.0, 128
      %617 = vxpose.xlu0.b32.cont [13/16] 0.0, 128
      %618 = vxpose.xlu0.b32.cont [14/16] 0.0, 128
      %619 = vxpose.xlu0.b32.cont [15/16] 0.0, 128
      %620 = vxpose.xlu0.b32.end [16/16] 0.0, 128
      %v621 = vpop.trf.xlu0
      %v622 = vpop.trf.xlu0
      %v623 = vpop.trf.xlu0
      %v624 = vpop.trf.xlu0
      %v625 = vpop.trf.xlu0
      %v626 = vpop.trf.xlu0
      %v627 = vpop.trf.xlu0
      %v628 = vpop.trf.xlu0
      %v629 = vpop.trf.xlu0
      %v630 = vpop.trf.xlu0
      %v631 = vpop.trf.xlu0
      %v632 = vpop.trf.xlu0
      %v633 = vpop.trf.xlu0
      %v634 = vpop.trf.xlu0
      %v635 = vpop.trf.xlu0
      %v636 = vpop.trf.xlu0
      %vm637 = vcmask 130048
      %v638 = vsel %vm637, %v621, 0.0
      %v639 = vsel %vm637, %v622, 0.0
      %v640 = vadd.f32 %v638, %v639
      %v641 = vsel %vm637, %v623, 0.0
      %v642 = vadd.f32 %v640, %v641
      %v643 = vsel %vm637, %v624, 0.0
      %v644 = vadd.f32 %v642, %v643
      %v645 = vsel %vm637, %v625, 0.0
      %v646 = vadd.f32 %v644, %v645
      %v647 = vsel %vm637, %v626, 0.0
      %v648 = vadd.f32 %v646, %v647
      %v649 = vsel %vm637, %v627, 0.0
      %v650 = vadd.f32 %v648, %v649
      %v651 = vsel %vm637, %v628, 0.0
      %v652 = vadd.f32 %v650, %v651
      %v653 = vrot.slane %v652, 4
      %v654 = vadd.f32 %v652, %v653
      %v655 = vrot.slane %v654, 2
      %v656 = vadd.f32 %v654, %v655
      %v657 = vrot.slane %v656, 1
      %v658 = vadd.f32 %v656, %v657
      %v659 = vld [vmem:[%s4] sm:$0xff]
      %v660 = vld [vmem:[%s4 + $0x8] sm:$0xff]
      %v662 = vsel %vm637, %v658, 0
      %664 = vmatpush.msra.mxu0 0.0
      %665 = vmatpush.msra.mxu0 0.0
      %666 = vmatpush.msra.mxu0 0.0
      %667 = vmatpush.msra.mxu0 0.0
      %668 = vmatpush.msra.mxu0 0.0
      %669 = vmatpush.msra.mxu0 0.0
      %670 = vmatpush.msra.mxu0 0.0
      %671 = vmatpush.msra.mxu0 0.0
      %672 = vmatpush.msra.mxu0 0.0
      %673 = vmatpush.msra.mxu0 0.0
      %674 = vmatpush.msra.mxu0 0.0
      %675 = vmatpush.msra.mxu0 0.0
      %676 = vmatpush.msra.mxu0 0.0
      %677 = vmatpush.msra.mxu0 0.0
      %678 = vmatpush.msra.mxu0 %v660
      %679 = vmatpush.msra.mxu0 %v659
      %680 = vmatmul.f32.gmra.mxu0 %v662
      %v681 = vpop.f32.mrf.mxu0
      %v682 = vadd.f32 0.0, %v681
      %683 = vdwg.mxu0
      %v684 = vperm.slane %v682, 0
      %v685 = vsub.f32 %v621, %v684
      %v686 = vsub.f32 %v622, %v684
      %v687 = vsub.f32 %v623, %v684
      %v688 = vsub.f32 %v624, %v684
      %v689 = vsub.f32 %v625, %v684
      %v690 = vsub.f32 %v626, %v684
      %v691 = vsub.f32 %v627, %v684
      %v692 = vsub.f32 %v628, %v684
      %v693 = vmul.f32 %v685, %v685
      %v694 = vmul.f32 %v686, %v686
      %v695 = vmul.f32 %v687, %v687
      %v696 = vmul.f32 %v688, %v688
      %v697 = vmul.f32 %v689, %v689
      %v698 = vmul.f32 %v690, %v690
      %v699 = vmul.f32 %v691, %v691
      %v700 = vmul.f32 %v692, %v692
      %v701 = vsel %vm637, %v693, 0.0
      %v702 = vsel %vm637, %v694, 0.0
      %v703 = vadd.f32 %v701, %v702
      %v704 = vsel %vm637, %v695, 0.0
      %v705 = vadd.f32 %v703, %v704
      %v706 = vsel %vm637, %v696, 0.0
      %v707 = vadd.f32 %v705, %v706
      %v708 = vsel %vm637, %v697, 0.0
      %v709 = vadd.f32 %v707, %v708
      %v710 = vsel %vm637, %v698, 0.0
      %v711 = vadd.f32 %v709, %v710
      %v712 = vsel %vm637, %v699, 0.0
      %v713 = vadd.f32 %v711, %v712
      %v714 = vsel %vm637, %v700, 0.0
      %v715 = vadd.f32 %v713, %v714
      %v716 = vrot.slane %v715, 4
      %v717 = vadd.f32 %v715, %v716
      %v718 = vrot.slane %v717, 2
      %v719 = vadd.f32 %v717, %v718
      %v720 = vrot.slane %v719, 1
      %v721 = vadd.f32 %v719, %v720
      %v723 = vsel %vm637, %v721, 0
      %725 = vmatpush.msra.mxu0 0.0
      %726 = vmatpush.msra.mxu0 0.0
      %727 = vmatpush.msra.mxu0 0.0
      %728 = vmatpush.msra.mxu0 0.0
      %729 = vmatpush.msra.mxu0 0.0
      %730 = vmatpush.msra.mxu0 0.0
      %731 = vmatpush.msra.mxu0 0.0
      %732 = vmatpush.msra.mxu0 0.0
      %733 = vmatpush.msra.mxu0 0.0
      %734 = vmatpush.msra.mxu0 0.0
      %735 = vmatpush.msra.mxu0 0.0
      %736 = vmatpush.msra.mxu0 0.0
      %737 = vmatpush.msra.mxu0 0.0
      %738 = vmatpush.msra.mxu0 0.0
      %739 = vmatpush.msra.mxu0 %v660
      %740 = vmatpush.msra.mxu0 %v659
      %741 = vmatmul.f32.gmra.mxu0 %v723
      %v742 = vpop.f32.mrf.mxu0
      %v743 = vadd.f32 1e-05, %v742
      %744 = vdwg.mxu0
      %v745 = vrsqrt.pop %v743
      %v746 = vmul.f32 %v745, %v743
      %v747 = vmul.f32 %v746, %v745
      %v748 = vmul.f32 0.5, %v747
      %v749 = vsub.f32 1.5, %v748
      %v750 = vmul.f32 %v745, %v749
      %vm751 = vweird.f32 %v743
      %vm752 = vweird.f32 %v745
      %vm753 = vmor %vm751, %vm752
      %v754 = vsel %vm753, %v745, %v750
      %v755 = vperm.slane %v754, 0
      %v756 = vmul.f32 %v685, %v755
      %v757 = vmul.f32 %v686, %v755
      %v758 = vmul.f32 %v687, %v755
      %v759 = vmul.f32 %v688, %v755
      %v760 = vmul.f32 %v689, %v755
      %v761 = vmul.f32 %v690, %v755
      %v762 = vmul.f32 %v691, %v755
      %v763 = vmul.f32 %v692, %v755
      %v764 = vld [vmem:[%s2] sm:$0x1]
      %v766 = vperm.slane %v764, 0
      %v768 = vmul.f32 %v756, %v766
      %v769 = vmul.f32 %v757, %v766
      %v770 = vmul.f32 %v758, %v766
      %v771 = vmul.f32 %v759, %v766
      %v772 = vmul.f32 %v760, %v766
      %v773 = vmul.f32 %v761, %v766
      %v774 = vmul.f32 %v762, %v766
      %v775 = vmul.f32 %v763, %v766
      %v776 = vld [vmem:[%s3] sm:$0x1]
      %v778 = vperm.slane %v776, 0
      %v780 = vadd.f32 %v768, %v778
      %v781 = vadd.f32 %v769, %v778
      %v782 = vadd.f32 %v770, %v778
      %v783 = vadd.f32 %v771, %v778
      %v784 = vadd.f32 %v772, %v778
      %v785 = vadd.f32 %v773, %v778
      %v786 = vadd.f32 %v774, %v778
      %v787 = vadd.f32 %v775, %v778
      %v788 = vxor.u32 %v780, 2147483648
      %v789 = vxor.u32 %v781, 2147483648
      %v790 = vxor.u32 %v782, 2147483648
      %v791 = vxor.u32 %v783, 2147483648
      %v792 = vxor.u32 %v784, 2147483648
      %v793 = vxor.u32 %v785, 2147483648
      %v794 = vxor.u32 %v786, 2147483648
      %v795 = vxor.u32 %v787, 2147483648
      %v796 = vmul.f32 %v788, 1.442695
      %v797 = vpow.pop %v796
      %v798 = vmul.f32 %v789, 1.442695
      %v799 = vpow.pop %v798
      %v800 = vmul.f32 %v790, 1.442695
      %v801 = vpow.pop %v800
      %v802 = vmul.f32 %v791, 1.442695
      %v803 = vpow.pop %v802
      %v804 = vmul.f32 %v792, 1.442695
      %v805 = vpow.pop %v804
      %v806 = vmul.f32 %v793, 1.442695
      %v807 = vpow.pop %v806
      %v808 = vmul.f32 %v794, 1.442695
      %v809 = vpow.pop %v808
      %v810 = vmul.f32 %v795, 1.442695
      %v811 = vpow.pop %v810
      %v812 = vadd.f32 %v797, 1.0
      %v813 = vadd.f32 %v799, 1.0
      %v814 = vadd.f32 %v801, 1.0
      %v815 = vadd.f32 %v803, 1.0
      %v816 = vadd.f32 %v805, 1.0
      %v817 = vadd.f32 %v807, 1.0
      %v818 = vadd.f32 %v809, 1.0
      %v819 = vadd.f32 %v811, 1.0
      %v820 = vrcp.pop %v812
      %v821 = vmul.f32 %v812, %v820
      %v822 = vsub.f32 1.0, %v821
      %v823 = vmul.f32 %v820, %v822
      %v824 = vadd.f32 %v820, %v823
      %vm825 = vweird.f32 %v812
      %vm826 = vweird.f32 %v820
      %vm827 = vmor %vm825, %vm826
      %v828 = vsel %vm827, %v820, %v824
      %v829 = vand.u32 2147483647, %v812
      %vm830 = vcmp.eq.f32.partialorder %v829, 8.507059e+37
      %v831 = vand.u32 %v812, 2147483648
      %v832 = vor.u32 1.1754944e-38, %v831
      %v833 = vsel %vm830, %v832, %v828
      %v834 = vmul.f32 1.0, %v833
      %v835 = vrcp.pop %v813
      %v836 = vmul.f32 %v813, %v835
      %v837 = vsub.f32 1.0, %v836
      %v838 = vmul.f32 %v835, %v837
      %v839 = vadd.f32 %v835, %v838
      %vm840 = vweird.f32 %v813
      %vm841 = vweird.f32 %v835
      %vm842 = vmor %vm840, %vm841
      %v843 = vsel %vm842, %v835, %v839
      %v844 = vand.u32 2147483647, %v813
      %vm845 = vcmp.eq.f32.partialorder %v844, 8.507059e+37
      %v846 = vand.u32 %v813, 2147483648
      %v847 = vor.u32 1.1754944e-38, %v846
      %v848 = vsel %vm845, %v847, %v843
      %v849 = vmul.f32 1.0, %v848
      %v850 = vrcp.pop %v814
      %v851 = vmul.f32 %v814, %v850
      %v852 = vsub.f32 1.0, %v851
      %v853 = vmul.f32 %v850, %v852
      %v854 = vadd.f32 %v850, %v853
      %vm855 = vweird.f32 %v814
      %vm856 = vweird.f32 %v850
      %vm857 = vmor %vm855, %vm856
      %v858 = vsel %vm857, %v850, %v854
      %v859 = vand.u32 2147483647, %v814
      %vm860 = vcmp.eq.f32.partialorder %v859, 8.507059e+37
      %v861 = vand.u32 %v814, 2147483648
      %v862 = vor.u32 1.1754944e-38, %v861
      %v863 = vsel %vm860, %v862, %v858
      %v864 = vmul.f32 1.0, %v863
      %v865 = vrcp.pop %v815
      %v866 = vmul.f32 %v815, %v865
      %v867 = vsub.f32 1.0, %v866
      %v868 = vmul.f32 %v865, %v867
      %v869 = vadd.f32 %v865, %v868
      %vm870 = vweird.f32 %v815
      %vm871 = vweird.f32 %v865
      %vm872 = vmor %vm870, %vm871
      %v873 = vsel %vm872, %v865, %v869
      %v874 = vand.u32 2147483647, %v815
      %vm875 = vcmp.eq.f32.partialorder %v874, 8.507059e+37
      %v876 = vand.u32 %v815, 2147483648
      %v877 = vor.u32 1.1754944e-38, %v876
      %v878 = vsel %vm875, %v877, %v873
      %v879 = vmul.f32 1.0, %v878
      %v880 = vrcp.pop %v816
      %v881 = vmul.f32 %v816, %v880
      %v882 = vsub.f32 1.0, %v881
      %v883 = vmul.f32 %v880, %v882
      %v884 = vadd.f32 %v880, %v883
      %vm885 = vweird.f32 %v816
      %vm886 = vweird.f32 %v880
      %vm887 = vmor %vm885, %vm886
      %v888 = vsel %vm887, %v880, %v884
      %v889 = vand.u32 2147483647, %v816
      %vm890 = vcmp.eq.f32.partialorder %v889, 8.507059e+37
      %v891 = vand.u32 %v816, 2147483648
      %v892 = vor.u32 1.1754944e-38, %v891
      %v893 = vsel %vm890, %v892, %v888
      %v894 = vmul.f32 1.0, %v893
      %v895 = vrcp.pop %v817
      %v896 = vmul.f32 %v817, %v895
      %v897 = vsub.f32 1.0, %v896
      %v898 = vmul.f32 %v895, %v897
      %v899 = vadd.f32 %v895, %v898
      %vm900 = vweird.f32 %v817
      %vm901 = vweird.f32 %v895
      %vm902 = vmor %vm900, %vm901
      %v903 = vsel %vm902, %v895, %v899
      %v904 = vand.u32 2147483647, %v817
      %vm905 = vcmp.eq.f32.partialorder %v904, 8.507059e+37
      %v906 = vand.u32 %v817, 2147483648
      %v907 = vor.u32 1.1754944e-38, %v906
      %v908 = vsel %vm905, %v907, %v903
      %v909 = vmul.f32 1.0, %v908
      %v910 = vrcp.pop %v818
      %v911 = vmul.f32 %v818, %v910
      %v912 = vsub.f32 1.0, %v911
      %v913 = vmul.f32 %v910, %v912
      %v914 = vadd.f32 %v910, %v913
      %vm915 = vweird.f32 %v818
      %vm916 = vweird.f32 %v910
      %vm917 = vmor %vm915, %vm916
      %v918 = vsel %vm917, %v910, %v914
      %v919 = vand.u32 2147483647, %v818
      %vm920 = vcmp.eq.f32.partialorder %v919, 8.507059e+37
      %v921 = vand.u32 %v818, 2147483648
      %v922 = vor.u32 1.1754944e-38, %v921
      %v923 = vsel %vm920, %v922, %v918
      %v924 = vmul.f32 1.0, %v923
      %v925 = vrcp.pop %v819
      %v926 = vmul.f32 %v819, %v925
      %v927 = vsub.f32 1.0, %v926
      %v928 = vmul.f32 %v925, %v927
      %v929 = vadd.f32 %v925, %v928
      %vm930 = vweird.f32 %v819
      %vm931 = vweird.f32 %v925
      %vm932 = vmor %vm930, %vm931
      %v933 = vsel %vm932, %v925, %v929
      %v934 = vand.u32 2147483647, %v819
      %vm935 = vcmp.eq.f32.partialorder %v934, 8.507059e+37
      %v936 = vand.u32 %v819, 2147483648
      %v937 = vor.u32 1.1754944e-38, %v936
      %v938 = vsel %vm935, %v937, %v933
      %v939 = vmul.f32 1.0, %v938
      %v940 = vmul.f32 %v780, %v834
      %v941 = vmul.f32 %v781, %v849
      %v942 = vmul.f32 %v782, %v864
      %v943 = vmul.f32 %v783, %v879
      %v944 = vmul.f32 %v784, %v894
      %v945 = vmul.f32 %v785, %v909
      %v946 = vmul.f32 %v786, %v924
      %v947 = vmul.f32 %v787, %v939
      %948 = vst.msk [vmem:[#allocation2] sm:$0xff] %vm637, 0.0
      %949 = vst.msk [vmem:[#allocation2 + $0x8] sm:$0xff] %vm637, 0.0
      %950 = vst.msk [vmem:[#allocation2 + $0x50] sm:$0xff] %vm637, 0.0
      %951 = vst.msk [vmem:[#allocation2 + $0x58] sm:$0xff] %vm637, 0.0
      %952 = vst.msk [vmem:[#allocation2 + $0x10] sm:$0xff] %vm637, %v940
      %953 = vst.msk [vmem:[#allocation2 + $0x18] sm:$0xff] %vm637, %v941
      %954 = vst.msk [vmem:[#allocation2 + $0x20] sm:$0xff] %vm637, %v942
      %955 = vst.msk [vmem:[#allocation2 + $0x28] sm:$0xff] %vm637, %v943
      %956 = vst.msk [vmem:[#allocation2 + $0x30] sm:$0xff] %vm637, %v944
      %957 = vst.msk [vmem:[#allocation2 + $0x38] sm:$0xff] %vm637, %v945
      %958 = vst.msk [vmem:[#allocation2 + $0x40] sm:$0xff] %vm637, %v946
      %959 = vst.msk [vmem:[#allocation2 + $0x48] sm:$0xff] %vm637, %v947
      %v960 = vld [vmem:[#allocation2 + $0x7] sm:$0xff]
      %v961 = vld [vmem:[#allocation2 + $0xf] sm:$0xff]
      %v962 = vld [vmem:[#allocation2 + $0x17] sm:$0xff]
      %v963 = vld [vmem:[#allocation2 + $0x1f] sm:$0xff]
      %v964 = vld [vmem:[#allocation2 + $0x27] sm:$0xff]
      %v965 = vld [vmem:[#allocation2 + $0x2f] sm:$0xff]
      %v966 = vld [vmem:[#allocation2 + $0x37] sm:$0xff]
      %v967 = vld [vmem:[#allocation2 + $0x3f] sm:$0xff]
      %v968 = vsel %vm587, 1, 0
      %v969 = vsel %vm588, 1, 0
      %v970 = vsel %vm589, 1, 0
      %v971 = vsel %vm590, 1, 0
      %v972 = vsel %vm591, 1, 0
      %v973 = vsel %vm592, 1, 0
      %v974 = vsel %vm593, 1, 0
      %v975 = vsel %vm594, 1, 0
      %vm976 = vcmp.eq.s32.totalorder %v968, 1
      %vm977 = vcmp.eq.s32.totalorder %v969, 1
      %vm978 = vcmp.eq.s32.totalorder %v970, 1
      %vm979 = vcmp.eq.s32.totalorder %v971, 1
      %vm980 = vcmp.eq.s32.totalorder %v972, 1
      %vm981 = vcmp.eq.s32.totalorder %v973, 1
      %vm982 = vcmp.eq.s32.totalorder %v974, 1
      %vm983 = vcmp.eq.s32.totalorder %v975, 1
      %v984 = vsel %vm976, %v960, 0.0
      %v985 = vsel %vm977, %v961, 0.0
      %v986 = vsel %vm978, %v962, 0.0
      %v987 = vsel %vm979, %v963, 0.0
      %v988 = vsel %vm980, %v964, 0.0
      %v989 = vsel %vm981, %v965, 0.0
      %v990 = vsel %vm982, %v966, 0.0
      %v991 = vsel %vm983, %v967, 0.0
      %v992 = vld [vmem:[#allocation2 + $0x8] sm:$0xff]
      %v993 = vld [vmem:[#allocation2 + $0x10] sm:$0xff]
      %v994 = vld [vmem:[#allocation2 + $0x18] sm:$0xff]
      %v995 = vld [vmem:[#allocation2 + $0x20] sm:$0xff]
      %v996 = vld [vmem:[#allocation2 + $0x28] sm:$0xff]
      %v997 = vld [vmem:[#allocation2 + $0x30] sm:$0xff]
      %v998 = vld [vmem:[#allocation2 + $0x38] sm:$0xff]
      %v999 = vld [vmem:[#allocation2 + $0x40] sm:$0xff]
      %v1000 = vld [vmem:[#allocation2 + $0x9] sm:$0xff]
      %v1001 = vld [vmem:[#allocation2 + $0x11] sm:$0xff]
      %v1002 = vld [vmem:[#allocation2 + $0x19] sm:$0xff]
      %v1003 = vld [vmem:[#allocation2 + $0x21] sm:$0xff]
      %v1004 = vld [vmem:[#allocation2 + $0x29] sm:$0xff]
      %v1005 = vld [vmem:[#allocation2 + $0x31] sm:$0xff]
      %v1006 = vld [vmem:[#allocation2 + $0x39] sm:$0xff]
      %v1007 = vld [vmem:[#allocation2 + $0x41] sm:$0xff]
      %v1008 = vsel %vm595, 1, 0
      %v1009 = vsel %vm596, 1, 0
      %v1010 = vsel %vm597, 1, 0
      %v1011 = vsel %vm598, 1, 0
      %v1012 = vsel %vm599, 1, 0
      %v1013 = vsel %vm600, 1, 0
      %v1014 = vsel %vm601, 1, 0
      %v1015 = vsel %vm602, 1, 0
      %vm1016 = vcmp.eq.s32.totalorder %v1008, 1
      %vm1017 = vcmp.eq.s32.totalorder %v1009, 1
      %vm1018 = vcmp.eq.s32.totalorder %v1010, 1
      %vm1019 = vcmp.eq.s32.totalorder %v1011, 1
      %vm1020 = vcmp.eq.s32.totalorder %v1012, 1
      %vm1021 = vcmp.eq.s32.totalorder %v1013, 1
      %vm1022 = vcmp.eq.s32.totalorder %v1014, 1
      %vm1023 = vcmp.eq.s32.totalorder %v1015, 1
      %v1024 = vsel %vm1016, %v1000, 0.0
      %v1025 = vsel %vm1017, %v1001, 0.0
      %v1026 = vsel %vm1018, %v1002, 0.0
      %v1027 = vsel %vm1019, %v1003, 0.0
      %v1028 = vsel %vm1020, %v1004, 0.0
      %v1029 = vsel %vm1021, %v1005, 0.0
      %v1030 = vsel %vm1022, %v1006, 0.0
      %v1031 = vsel %vm1023, %v1007, 0.0
      %v1032 = vld [vmem:[#allocation2 + $0x47] sm:$0xff]
      %v1033 = vsel %vm976, %v961, 0.0
      %v1034 = vsel %vm977, %v962, 0.0
      %v1035 = vsel %vm978, %v963, 0.0
      %v1036 = vsel %vm979, %v964, 0.0
      %v1037 = vsel %vm980, %v965, 0.0
      %v1038 = vsel %vm981, %v966, 0.0
      %v1039 = vsel %vm982, %v967, 0.0
      %v1040 = vsel %vm983, %v1032, 0.0
      %v1041 = vld [vmem:[#allocation2 + $0x48] sm:$0xff]
      %v1042 = vld [vmem:[#allocation2 + $0x49] sm:$0xff]
      %v1043 = vsel %vm1016, %v1001, 0.0
      %v1044 = vsel %vm1017, %v1002, 0.0
      %v1045 = vsel %vm1018, %v1003, 0.0
      %v1046 = vsel %vm1019, %v1004, 0.0
      %v1047 = vsel %vm1020, %v1005, 0.0
      %v1048 = vsel %vm1021, %v1006, 0.0
      %v1049 = vsel %vm1022, %v1007, 0.0
      %v1050 = vsel %vm1023, %v1042, 0.0
      %v1051 = vld [vmem:[#allocation2 + $0x4f] sm:$0xff]
      %v1052 = vsel %vm976, %v962, 0.0
      %v1053 = vsel %vm977, %v963, 0.0
      %v1054 = vsel %vm978, %v964, 0.0
      %v1055 = vsel %vm979, %v965, 0.0
      %v1056 = vsel %vm980, %v966, 0.0
      %v1057 = vsel %vm981, %v967, 0.0
      %v1058 = vsel %vm982, %v1032, 0.0
      %v1059 = vsel %vm983, %v1051, 0.0
      %v1060 = vld [vmem:[#allocation2 + $0x50] sm:$0xff]
      %v1061 = vld [vmem:[#allocation2 + $0x51] sm:$0xff]
      %v1062 = vsel %vm1016, %v1002, 0.0
      %v1063 = vsel %vm1017, %v1003, 0.0
      %v1064 = vsel %vm1018, %v1004, 0.0
      %v1065 = vsel %vm1019, %v1005, 0.0
      %v1066 = vsel %vm1020, %v1006, 0.0
      %v1067 = vsel %vm1021, %v1007, 0.0
      %v1068 = vsel %vm1022, %v1042, 0.0
      %v1069 = vsel %vm1023, %v1061, 0.0
      %1078 = vrot.lane.b32.xlu0 %v992, 16
      %v1079 = vpop.permute.xlu0 %1078
      %1080 = vrot.lane.b32.xlu0 %v993, 16
      %v1081 = vpop.permute.xlu0 %1080
      %1082 = vrot.lane.b32.xlu0 %v994, 16
      %v1083 = vpop.permute.xlu0 %1082
      %1084 = vrot.lane.b32.xlu0 %v995, 16
      %v1085 = vpop.permute.xlu0 %1084
      %1086 = vrot.lane.b32.xlu0 %v996, 16
      %v1087 = vpop.permute.xlu0 %1086
      %1088 = vrot.lane.b32.xlu0 %v997, 16
      %v1089 = vpop.permute.xlu0 %1088
      %1090 = vrot.lane.b32.xlu0 %v998, 16
      %v1091 = vpop.permute.xlu0 %1090
      %1092 = vrot.lane.b32.xlu0 %v999, 16
      %v1093 = vpop.permute.xlu0 %1092
      %1110 = vrot.lane.b32.xlu0 %v1024, 32
      %v1111 = vpop.permute.xlu0 %1110
      %1112 = vrot.lane.b32.xlu0 %v1025, 32
      %v1113 = vpop.permute.xlu0 %1112
      %1114 = vrot.lane.b32.xlu0 %v1026, 32
      %v1115 = vpop.permute.xlu0 %1114
      %1116 = vrot.lane.b32.xlu0 %v1027, 32
      %v1117 = vpop.permute.xlu0 %1116
      %1118 = vrot.lane.b32.xlu0 %v1028, 32
      %v1119 = vpop.permute.xlu0 %1118
      %1120 = vrot.lane.b32.xlu0 %v1029, 32
      %v1121 = vpop.permute.xlu0 %1120
      %1122 = vrot.lane.b32.xlu0 %v1030, 32
      %v1123 = vpop.permute.xlu0 %1122
      %1124 = vrot.lane.b32.xlu0 %v1031, 32
      %v1125 = vpop.permute.xlu0 %1124
      %1142 = vrot.lane.b32.xlu0 %v1033, 48
      %v1143 = vpop.permute.xlu0 %1142
      %1144 = vrot.lane.b32.xlu0 %v1034, 48
      %v1145 = vpop.permute.xlu0 %1144
      %1146 = vrot.lane.b32.xlu0 %v1035, 48
      %v1147 = vpop.permute.xlu0 %1146
      %1148 = vrot.lane.b32.xlu0 %v1036, 48
      %v1149 = vpop.permute.xlu0 %1148
      %1150 = vrot.lane.b32.xlu0 %v1037, 48
      %v1151 = vpop.permute.xlu0 %1150
      %1152 = vrot.lane.b32.xlu0 %v1038, 48
      %v1153 = vpop.permute.xlu0 %1152
      %1154 = vrot.lane.b32.xlu0 %v1039, 48
      %v1155 = vpop.permute.xlu0 %1154
      %1156 = vrot.lane.b32.xlu0 %v1040, 48
      %v1157 = vpop.permute.xlu0 %1156
      %1167 = vrot.lane.b32.xlu0 %v993, 64
      %v1168 = vpop.permute.xlu0 %1167
      %1169 = vrot.lane.b32.xlu0 %v994, 64
      %v1170 = vpop.permute.xlu0 %1169
      %1171 = vrot.lane.b32.xlu0 %v995, 64
      %v1172 = vpop.permute.xlu0 %1171
      %1173 = vrot.lane.b32.xlu0 %v996, 64
      %v1174 = vpop.permute.xlu0 %1173
      %1175 = vrot.lane.b32.xlu0 %v997, 64
      %v1176 = vpop.permute.xlu0 %1175
      %1177 = vrot.lane.b32.xlu0 %v998, 64
      %v1178 = vpop.permute.xlu0 %1177
      %1179 = vrot.lane.b32.xlu0 %v999, 64
      %v1180 = vpop.permute.xlu0 %1179
      %1181 = vrot.lane.b32.xlu0 %v1041, 64
      %v1182 = vpop.permute.xlu0 %1181
      %1199 = vrot.lane.b32.xlu0 %v1043, 80
      %v1200 = vpop.permute.xlu0 %1199
      %1201 = vrot.lane.b32.xlu0 %v1044, 80
      %v1202 = vpop.permute.xlu0 %1201
      %1203 = vrot.lane.b32.xlu0 %v1045, 80
      %v1204 = vpop.permute.xlu0 %1203
      %1205 = vrot.lane.b32.xlu0 %v1046, 80
      %v1206 = vpop.permute.xlu0 %1205
      %1207 = vrot.lane.b32.xlu0 %v1047, 80
      %v1208 = vpop.permute.xlu0 %1207
      %1209 = vrot.lane.b32.xlu0 %v1048, 80
      %v1210 = vpop.permute.xlu0 %1209
      %1211 = vrot.lane.b32.xlu0 %v1049, 80
      %v1212 = vpop.permute.xlu0 %1211
      %1213 = vrot.lane.b32.xlu0 %v1050, 80
      %v1214 = vpop.permute.xlu0 %1213
      %1231 = vrot.lane.b32.xlu0 %v1052, 96
      %v1232 = vpop.permute.xlu0 %1231
      %1233 = vrot.lane.b32.xlu0 %v1053, 96
      %v1234 = vpop.permute.xlu0 %1233
      %1235 = vrot.lane.b32.xlu0 %v1054, 96
      %v1236 = vpop.permute.xlu0 %1235
      %1237 = vrot.lane.b32.xlu0 %v1055, 96
      %v1238 = vpop.permute.xlu0 %1237
      %1239 = vrot.lane.b32.xlu0 %v1056, 96
      %v1240 = vpop.permute.xlu0 %1239
      %1241 = vrot.lane.b32.xlu0 %v1057, 96
      %v1242 = vpop.permute.xlu0 %1241
      %1243 = vrot.lane.b32.xlu0 %v1058, 96
      %v1244 = vpop.permute.xlu0 %1243
      %1245 = vrot.lane.b32.xlu0 %v1059, 96
      %v1246 = vpop.permute.xlu0 %1245
      %1256 = vrot.lane.b32.xlu0 %v994, 112
      %v1257 = vpop.permute.xlu0 %1256
      %1258 = vrot.lane.b32.xlu0 %v995, 112
      %v1259 = vpop.permute.xlu0 %1258
      %1260 = vrot.lane.b32.xlu0 %v996, 112
      %v1261 = vpop.permute.xlu0 %1260
      %1262 = vrot.lane.b32.xlu0 %v997, 112
      %v1263 = vpop.permute.xlu0 %1262
      %1264 = vrot.lane.b32.xlu0 %v998, 112
      %v1265 = vpop.permute.xlu0 %1264
      %1266 = vrot.lane.b32.xlu0 %v999, 112
      %v1267 = vpop.permute.xlu0 %1266
      %1268 = vrot.lane.b32.xlu0 %v1041, 112
      %v1269 = vpop.permute.xlu0 %1268
      %1270 = vrot.lane.b32.xlu0 %v1060, 112
      %v1271 = vpop.permute.xlu0 %1270
      %v1280 = vsel %vm637, %v984, %v1079
      %v1281 = vsel %vm637, %v985, %v1081
      %v1282 = vsel %vm637, %v986, %v1083
      %v1283 = vsel %vm637, %v987, %v1085
      %v1284 = vsel %vm637, %v988, %v1087
      %v1285 = vsel %vm637, %v989, %v1089
      %v1286 = vsel %vm637, %v990, %v1091
      %v1287 = vsel %vm637, %v991, %v1093
      %vm1288 = vcmask 261120
      %v1289 = vsel %vm1288, %v1280, %v1111
      %v1290 = vsel %vm1288, %v1281, %v1113
      %v1291 = vsel %vm1288, %v1282, %v1115
      %v1292 = vsel %vm1288, %v1283, %v1117
      %v1293 = vsel %vm1288, %v1284, %v1119
      %v1294 = vsel %vm1288, %v1285, %v1121
      %v1295 = vsel %vm1288, %v1286, %v1123
      %v1296 = vsel %vm1288, %v1287, %v1125
      %vm1297 = vcmask 392192
      %v1298 = vsel %vm1297, %v1289, %v1143
      %v1299 = vsel %vm1297, %v1290, %v1145
      %v1300 = vsel %vm1297, %v1291, %v1147
      %v1301 = vsel %vm1297, %v1292, %v1149
      %v1302 = vsel %vm1297, %v1293, %v1151
      %v1303 = vsel %vm1297, %v1294, %v1153
      %v1304 = vsel %vm1297, %v1295, %v1155
      %v1305 = vsel %vm1297, %v1296, %v1157
      %vm1306 = vcmask 523264
      %v1307 = vsel %vm1306, %v1298, %v1168
      %v1308 = vsel %vm1306, %v1299, %v1170
      %v1309 = vsel %vm1306, %v1300, %v1172
      %v1310 = vsel %vm1306, %v1301, %v1174
      %v1311 = vsel %vm1306, %v1302, %v1176
      %v1312 = vsel %vm1306, %v1303, %v1178
      %v1313 = vsel %vm1306, %v1304, %v1180
      %v1314 = vsel %vm1306, %v1305, %v1182
      %vm1315 = vcmask 654336
      %v1316 = vsel %vm1315, %v1307, %v1200
      %v1317 = vsel %vm1315, %v1308, %v1202
      %v1318 = vsel %vm1315, %v1309, %v1204
      %v1319 = vsel %vm1315, %v1310, %v1206
      %v1320 = vsel %vm1315, %v1311, %v1208
      %v1321 = vsel %vm1315, %v1312, %v1210
      %v1322 = vsel %vm1315, %v1313, %v1212
      %v1323 = vsel %vm1315, %v1314, %v1214
      %vm1324 = vcmask 785408
      %v1325 = vsel %vm1324, %v1316, %v1232
      %v1326 = vsel %vm1324, %v1317, %v1234
      %v1327 = vsel %vm1324, %v1318, %v1236
      %v1328 = vsel %vm1324, %v1319, %v1238
      %v1329 = vsel %vm1324, %v1320, %v1240
      %v1330 = vsel %vm1324, %v1321, %v1242
      %v1331 = vsel %vm1324, %v1322, %v1244
      %v1332 = vsel %vm1324, %v1323, %v1246
      %vm1333 = vcmask 916480
      %v1334 = vsel %vm1333, %v1325, %v1257
      %v1335 = vsel %vm1333, %v1326, %v1259
      %v1336 = vsel %vm1333, %v1327, %v1261
      %v1337 = vsel %vm1333, %v1328, %v1263
      %v1338 = vsel %vm1333, %v1329, %v1265
      %v1339 = vsel %vm1333, %v1330, %v1267
      %v1340 = vsel %vm1333, %v1331, %v1269
      %v1341 = vsel %vm1333, %v1332, %v1271
      %v1342 = vld [vmem:[%s5] sm:$0xff]
      %v1343 = vld [vmem:[%s5 + $0x8] sm:$0xff]
      %v1344 = vld [vmem:[%s5 + $0x10] sm:$0xff]
      %v1345 = vld [vmem:[%s5 + $0x18] sm:$0xff]
      %v1346 = vld [vmem:[%s5 + $0x20] sm:$0xff]
      %v1347 = vld [vmem:[%s5 + $0x28] sm:$0xff]
      %v1348 = vld [vmem:[%s5 + $0x30] sm:$0xff]
      %v1349 = vld [vmem:[%s5 + $0x38] sm:$0xff]
      %v1350 = vld [vmem:[%s5 + $0x40] sm:$0xff]
      %v1351 = vld [vmem:[%s5 + $0x48] sm:$0xff]
      %v1352 = vld [vmem:[%s5 + $0x50] sm:$0xff]
      %v1353 = vld [vmem:[%s5 + $0x58] sm:$0xff]
      %v1354 = vld [vmem:[%s5 + $0x60] sm:$0xff]
      %v1355 = vld [vmem:[%s5 + $0x68] sm:$0xff]
      %v1356 = vld [vmem:[%s5 + $0x70] sm:$0xff]
      %v1357 = vld [vmem:[%s5 + $0x78] sm:$0xff]
      %v1358 = vld [vmem:[%s5 + $0x80] sm:$0xff]
      %v1359 = vld [vmem:[%s5 + $0x88] sm:$0xff]
      %v1360 = vld [vmem:[%s476] sm:$0x1]
      %v1361 = vxor.u32 %v1360, 2147483648
      %v1362 = vmul.f32 %v1361, 1.442695
      %v1363 = vpow.pop %v1362
      %v1364 = vadd.f32 %v1363, 1.0
      %v1365 = vrcp.pop %v1364
      %v1366 = vmul.f32 %v1364, %v1365
      %v1367 = vsub.f32 1.0, %v1366
      %v1368 = vmul.f32 %v1365, %v1367
      %v1369 = vadd.f32 %v1365, %v1368
      %vm1370 = vweird.f32 %v1364
      %vm1371 = vweird.f32 %v1365
      %vm1372 = vmor %vm1370, %vm1371
      %v1373 = vsel %vm1372, %v1365, %v1369
      %v1374 = vand.u32 2147483647, %v1364
      %vm1375 = vcmp.eq.f32.partialorder %v1374, 8.507059e+37
      %v1376 = vand.u32 %v1364, 2147483648
      %v1377 = vor.u32 1.1754944e-38, %v1376
      %v1378 = vsel %vm1375, %v1377, %v1373
      %v1379 = vmul.f32 1.0, %v1378
      %v1380 = vmul.f32 %v1360, %v1379
      %v1381 = vld [vmem:[%s7] sm:$0xff]
      %v1382 = vld [vmem:[%s7 + $0x8] sm:$0xff]
      %v1383 = vld [vmem:[%s7 + $0x10] sm:$0xff]
      %v1384 = vld [vmem:[%s7 + $0x18] sm:$0xff]
      %v1385 = vld [vmem:[%s8] sm:$0x1]
      %v1387 = vsel %vm1288, %v1380, 0
      %1389 = vmatpush.msra.mxu0 0.0
      %1390 = vmatpush.msra.mxu0 0.0
      %1391 = vmatpush.msra.mxu0 0.0
      %1392 = vmatpush.msra.mxu0 0.0
      %1393 = vmatpush.msra.mxu0 0.0
      %1394 = vmatpush.msra.mxu0 0.0
      %1395 = vmatpush.msra.mxu0 0.0
      %1396 = vmatpush.msra.mxu0 0.0
      %1397 = vmatpush.msra.mxu0 0.0
      %1398 = vmatpush.msra.mxu0 0.0
      %1399 = vmatpush.msra.mxu0 0.0
      %1400 = vmatpush.msra.mxu0 0.0
      %1401 = vmatpush.msra.mxu0 %v1384
      %1402 = vmatpush.msra.mxu0 %v1383
      %1403 = vmatpush.msra.mxu0 %v1382
      %1404 = vmatpush.msra.mxu0 %v1381
      %1405 = vmatmul.f32.gmra.mxu0 %v1387
      %v1406 = vpop.f32.mrf.mxu0
      %v1407 = vadd.f32 %v1385, %v1406
      %1408 = vdwg.mxu0
      %v1409 = vld [vmem:[%s6] sm:$0x1]
      %v1410 = vadd.f32 %v1409, %v1407
      %v1412 = vperm.slane %v1410, 0
      %v1415 = vsel %vm637, %v1062, 0
      %v1418 = vsel %vm637, %v1063, 0
      %v1421 = vsel %vm637, %v1064, 0
      %v1424 = vsel %vm637, %v1065, 0
      %v1427 = vsel %vm637, %v1066, 0
      %v1430 = vsel %vm637, %v1067, 0
      %v1433 = vsel %vm637, %v1068, 0
      %v1436 = vsel %vm637, %v1069, 0
      %1438 = vmatpush.msra.mxu0 %v1357
      %1439 = vmatpush.msra.mxu0 %v1356
      %1440 = vmatpush.msra.mxu0 %v1355
      %1441 = vmatpush.msra.mxu0 %v1354
      %1442 = vmatpush.msra.mxu0 %v1353
      %1443 = vmatpush.msra.mxu0 %v1352
      %1444 = vmatpush.msra.mxu0 %v1351
      %1445 = vmatpush.msra.mxu0 %v1350
      %1446 = vmatpush.msra.mxu0 %v1349
      %1447 = vmatpush.msra.mxu0 %v1348
      %1448 = vmatpush.msra.mxu0 %v1347
      %1449 = vmatpush.msra.mxu0 %v1346
      %1450 = vmatpush.msra.mxu0 %v1345
      %1451 = vmatpush.msra.mxu0 %v1344
      %1452 = vmatpush.msra.mxu0 %v1343
      %1453 = vmatpush.msra.mxu0 %v1342
      %1454 = vmatmul.f32.gmra.mxu0 %v1334
      %v1455 = vpop.f32.mrf.mxu0
      %v1456 = vadd.f32 %v1412, %v1455
      %1457 = vmatmul.f32.gmra.mxu0 %v1335
      %v1458 = vpop.f32.mrf.mxu0
      %v1459 = vadd.f32 %v1412, %v1458
      %1460 = vmatmul.f32.gmra.mxu0 %v1336
      %v1461 = vpop.f32.mrf.mxu0
      %v1462 = vadd.f32 %v1412, %v1461
      %1463 = vmatmul.f32.gmra.mxu0 %v1337
      %v1464 = vpop.f32.mrf.mxu0
      %v1465 = vadd.f32 %v1412, %v1464
      %1466 = vmatmul.f32.gmra.mxu0 %v1338
      %v1467 = vpop.f32.mrf.mxu0
      %v1468 = vadd.f32 %v1412, %v1467
      %1469 = vmatmul.f32.gmra.mxu0 %v1339
      %v1470 = vpop.f32.mrf.mxu0
      %v1471 = vadd.f32 %v1412, %v1470
      %1472 = vmatmul.f32.gmra.mxu0 %v1340
      %v1473 = vpop.f32.mrf.mxu0
      %v1474 = vadd.f32 %v1412, %v1473
      %1475 = vmatmul.f32.gmra.mxu0 %v1341
      %v1476 = vpop.f32.mrf.mxu0
      %v1477 = vadd.f32 %v1412, %v1476
      %1478 = vdwg.mxu0
      %1479 = vmatpush.msra.mxu0 0.0
      %1480 = vmatpush.msra.mxu0 0.0
      %1481 = vmatpush.msra.mxu0 0.0
      %1482 = vmatpush.msra.mxu0 0.0
      %1483 = vmatpush.msra.mxu0 0.0
      %1484 = vmatpush.msra.mxu0 0.0
      %1485 = vmatpush.msra.mxu0 0.0
      %1486 = vmatpush.msra.mxu0 0.0
      %1487 = vmatpush.msra.mxu0 0.0
      %1488 = vmatpush.msra.mxu0 0.0
      %1489 = vmatpush.msra.mxu0 0.0
      %1490 = vmatpush.msra.mxu0 0.0
      %1491 = vmatpush.msra.mxu0 0.0
      %1492 = vmatpush.msra.mxu0 0.0
      %1493 = vmatpush.msra.mxu0 %v1359
      %1494 = vmatpush.msra.mxu0 %v1358
      %1495 = vmatmul.f32.gmra.mxu0 %v1415
      %v1496 = vpop.f32.mrf.mxu0
      %v1497 = vadd.f32 %v1456, %v1496
      %1498 = vmatmul.f32.gmra.mxu0 %v1418
      %v1499 = vpop.f32.mrf.mxu0
      %v1500 = vadd.f32 %v1459, %v1499
      %1501 = vmatmul.f32.gmra.mxu0 %v1421
      %v1502 = vpop.f32.mrf.mxu0
      %v1503 = vadd.f32 %v1462, %v1502
      %1504 = vmatmul.f32.gmra.mxu0 %v1424
      %v1505 = vpop.f32.mrf.mxu0
      %v1506 = vadd.f32 %v1465, %v1505
      %1507 = vmatmul.f32.gmra.mxu0 %v1427
      %v1508 = vpop.f32.mrf.mxu0
      %v1509 = vadd.f32 %v1468, %v1508
      %1510 = vmatmul.f32.gmra.mxu0 %v1430
      %v1511 = vpop.f32.mrf.mxu0
      %v1512 = vadd.f32 %v1471, %v1511
      %1513 = vmatmul.f32.gmra.mxu0 %v1433
      %v1514 = vpop.f32.mrf.mxu0
      %v1515 = vadd.f32 %v1474, %v1514
      %1516 = vmatmul.f32.gmra.mxu0 %v1436
      %v1517 = vpop.f32.mrf.mxu0
      %v1518 = vadd.f32 %v1477, %v1517
      %1519 = vdwg.mxu0
      %v1520 = vsel %vm1288, %v1497, 0.0
      %v1521 = vsel %vm1288, %v1500, 0.0
      %v1522 = vadd.f32 %v1520, %v1521
      %v1523 = vsel %vm1288, %v1503, 0.0
      %v1524 = vadd.f32 %v1522, %v1523
      %v1525 = vsel %vm1288, %v1506, 0.0
      %v1526 = vadd.f32 %v1524, %v1525
      %v1527 = vsel %vm1288, %v1509, 0.0
      %v1528 = vadd.f32 %v1526, %v1527
      %v1529 = vsel %vm1288, %v1512, 0.0
      %v1530 = vadd.f32 %v1528, %v1529
      %v1531 = vsel %vm1288, %v1515, 0.0
      %v1532 = vadd.f32 %v1530, %v1531
      %v1533 = vsel %vm1288, %v1518, 0.0
      %v1534 = vadd.f32 %v1532, %v1533
      %v1535 = vrot.slane %v1534, 4
      %v1536 = vadd.f32 %v1534, %v1535
      %v1537 = vrot.slane %v1536, 2
      %v1538 = vadd.f32 %v1536, %v1537
      %v1539 = vrot.slane %v1538, 1
      %v1540 = vadd.f32 %v1538, %v1539
      %v1541 = vld [vmem:[%s11] sm:$0xff]
      %v1542 = vld [vmem:[%s11 + $0x8] sm:$0xff]
      %v1543 = vld [vmem:[%s11 + $0x10] sm:$0xff]
      %v1544 = vld [vmem:[%s11 + $0x18] sm:$0xff]
      %v1546 = vsel %vm1288, %v1540, 0
      %1548 = vmatpush.msra.mxu0 0.0
      %1549 = vmatpush.msra.mxu0 0.0
      %1550 = vmatpush.msra.mxu0 0.0
      %1551 = vmatpush.msra.mxu0 0.0
      %1552 = vmatpush.msra.mxu0 0.0
      %1553 = vmatpush.msra.mxu0 0.0
      %1554 = vmatpush.msra.mxu0 0.0
      %1555 = vmatpush.msra.mxu0 0.0
      %1556 = vmatpush.msra.mxu0 0.0
      %1557 = vmatpush.msra.mxu0 0.0
      %1558 = vmatpush.msra.mxu0 0.0
      %1559 = vmatpush.msra.mxu0 0.0
      %1560 = vmatpush.msra.mxu0 %v1544
      %1561 = vmatpush.msra.mxu0 %v1543
      %1562 = vmatpush.msra.mxu0 %v1542
      %1563 = vmatpush.msra.mxu0 %v1541
      %1564 = vmatmul.f32.gmra.mxu0 %v1546
      %v1565 = vpop.f32.mrf.mxu0
      %v1566 = vadd.f32 0.0, %v1565
      %1567 = vdwg.mxu0
      %v1568 = vperm.slane %v1566, 0
      %v1569 = vsub.f32 %v1497, %v1568
      %v1570 = vsub.f32 %v1500, %v1568
      %v1571 = vsub.f32 %v1503, %v1568
      %v1572 = vsub.f32 %v1506, %v1568
      %v1573 = vsub.f32 %v1509, %v1568
      %v1574 = vsub.f32 %v1512, %v1568
      %v1575 = vsub.f32 %v1515, %v1568
      %v1576 = vsub.f32 %v1518, %v1568
      %v1577 = vmul.f32 %v1569, %v1569
      %v1578 = vmul.f32 %v1570, %v1570
      %v1579 = vmul.f32 %v1571, %v1571
      %v1580 = vmul.f32 %v1572, %v1572
      %v1581 = vmul.f32 %v1573, %v1573
      %v1582 = vmul.f32 %v1574, %v1574
      %v1583 = vmul.f32 %v1575, %v1575
      %v1584 = vmul.f32 %v1576, %v1576
      %v1585 = vsel %vm1288, %v1577, 0.0
      %v1586 = vsel %vm1288, %v1578, 0.0
      %v1587 = vadd.f32 %v1585, %v1586
      %v1588 = vsel %vm1288, %v1579, 0.0
      %v1589 = vadd.f32 %v1587, %v1588
      %v1590 = vsel %vm1288, %v1580, 0.0
      %v1591 = vadd.f32 %v1589, %v1590
      %v1592 = vsel %vm1288, %v1581, 0.0
      %v1593 = vadd.f32 %v1591, %v1592
      %v1594 = vsel %vm1288, %v1582, 0.0
      %v1595 = vadd.f32 %v1593, %v1594
      %v1596 = vsel %vm1288, %v1583, 0.0
      %v1597 = vadd.f32 %v1595, %v1596
      %v1598 = vsel %vm1288, %v1584, 0.0
      %v1599 = vadd.f32 %v1597, %v1598
      %v1600 = vrot.slane %v1599, 4
      %v1601 = vadd.f32 %v1599, %v1600
      %v1602 = vrot.slane %v1601, 2
      %v1603 = vadd.f32 %v1601, %v1602
      %v1604 = vrot.slane %v1603, 1
      %v1605 = vadd.f32 %v1603, %v1604
      %v1607 = vsel %vm1288, %v1605, 0
      %1609 = vmatpush.msra.mxu0 0.0
      %1610 = vmatpush.msra.mxu0 0.0
      %1611 = vmatpush.msra.mxu0 0.0
      %1612 = vmatpush.msra.mxu0 0.0
      %1613 = vmatpush.msra.mxu0 0.0
      %1614 = vmatpush.msra.mxu0 0.0
      %1615 = vmatpush.msra.mxu0 0.0
      %1616 = vmatpush.msra.mxu0 0.0
      %1617 = vmatpush.msra.mxu0 0.0
      %1618 = vmatpush.msra.mxu0 0.0
      %1619 = vmatpush.msra.mxu0 0.0
      %1620 = vmatpush.msra.mxu0 0.0
      %1621 = vmatpush.msra.mxu0 %v1544
      %1622 = vmatpush.msra.mxu0 %v1543
      %1623 = vmatpush.msra.mxu0 %v1542
      %1624 = vmatpush.msra.mxu0 %v1541
      %1625 = vmatmul.f32.gmra.mxu0 %v1607
      %v1626 = vpop.f32.mrf.mxu0
      %v1627 = vadd.f32 1e-05, %v1626
      %1628 = vdwg.mxu0
      %v1629 = vrsqrt.pop %v1627
      %v1630 = vmul.f32 %v1629, %v1627
      %v1631 = vmul.f32 %v1630, %v1629
      %v1632 = vmul.f32 0.5, %v1631
      %v1633 = vsub.f32 1.5, %v1632
      %v1634 = vmul.f32 %v1629, %v1633
      %vm1635 = vweird.f32 %v1627
      %vm1636 = vweird.f32 %v1629
      %vm1637 = vmor %vm1635, %vm1636
      %v1638 = vsel %vm1637, %v1629, %v1634
      %v1639 = vperm.slane %v1638, 0
      %v1640 = vmul.f32 %v1569, %v1639
      %v1641 = vmul.f32 %v1570, %v1639
      %v1642 = vmul.f32 %v1571, %v1639
      %v1643 = vmul.f32 %v1572, %v1639
      %v1644 = vmul.f32 %v1573, %v1639
      %v1645 = vmul.f32 %v1574, %v1639
      %v1646 = vmul.f32 %v1575, %v1639
      %v1647 = vmul.f32 %v1576, %v1639
      %v1648 = vld [vmem:[%s9] sm:$0x1]
      %v1650 = vperm.slane %v1648, 0
      %v1652 = vmul.f32 %v1640, %v1650
      %v1653 = vmul.f32 %v1641, %v1650
      %v1654 = vmul.f32 %v1642, %v1650
      %v1655 = vmul.f32 %v1643, %v1650
      %v1656 = vmul.f32 %v1644, %v1650
      %v1657 = vmul.f32 %v1645, %v1650
      %v1658 = vmul.f32 %v1646, %v1650
      %v1659 = vmul.f32 %v1647, %v1650
      %v1660 = vld [vmem:[%s10] sm:$0x1]
      %v1662 = vperm.slane %v1660, 0
      %v1664 = vadd.f32 %v1652, %v1662
      %v1665 = vadd.f32 %v1653, %v1662
      %v1666 = vadd.f32 %v1654, %v1662
      %v1667 = vadd.f32 %v1655, %v1662
      %v1668 = vadd.f32 %v1656, %v1662
      %v1669 = vadd.f32 %v1657, %v1662
      %v1670 = vadd.f32 %v1658, %v1662
      %v1671 = vadd.f32 %v1659, %v1662
      %v1672 = vxor.u32 %v1664, 2147483648
      %v1673 = vxor.u32 %v1665, 2147483648
      %v1674 = vxor.u32 %v1666, 2147483648
      %v1675 = vxor.u32 %v1667, 2147483648
      %v1676 = vxor.u32 %v1668, 2147483648
      %v1677 = vxor.u32 %v1669, 2147483648
      %v1678 = vxor.u32 %v1670, 2147483648
      %v1679 = vxor.u32 %v1671, 2147483648
      %v1680 = vmul.f32 %v1672, 1.442695
      %v1681 = vpow.pop %v1680
      %v1682 = vmul.f32 %v1673, 1.442695
      %v1683 = vpow.pop %v1682
      %v1684 = vmul.f32 %v1674, 1.442695
      %v1685 = vpow.pop %v1684
      %v1686 = vmul.f32 %v1675, 1.442695
      %v1687 = vpow.pop %v1686
      %v1688 = vmul.f32 %v1676, 1.442695
      %v1689 = vpow.pop %v1688
      %v1690 = vmul.f32 %v1677, 1.442695
      %v1691 = vpow.pop %v1690
      %v1692 = vmul.f32 %v1678, 1.442695
      %v1693 = vpow.pop %v1692
      %v1694 = vmul.f32 %v1679, 1.442695
      %v1695 = vpow.pop %v1694
      %v1696 = vadd.f32 %v1681, 1.0
      %v1697 = vadd.f32 %v1683, 1.0
      %v1698 = vadd.f32 %v1685, 1.0
      %v1699 = vadd.f32 %v1687, 1.0
      %v1700 = vadd.f32 %v1689, 1.0
      %v1701 = vadd.f32 %v1691, 1.0
      %v1702 = vadd.f32 %v1693, 1.0
      %v1703 = vadd.f32 %v1695, 1.0
      %v1704 = vrcp.pop %v1696
      %v1705 = vmul.f32 %v1696, %v1704
      %v1706 = vsub.f32 1.0, %v1705
      %v1707 = vmul.f32 %v1704, %v1706
      %v1708 = vadd.f32 %v1704, %v1707
      %vm1709 = vweird.f32 %v1696
      %vm1710 = vweird.f32 %v1704
      %vm1711 = vmor %vm1709, %vm1710
      %v1712 = vsel %vm1711, %v1704, %v1708
      %v1713 = vand.u32 2147483647, %v1696
      %vm1714 = vcmp.eq.f32.partialorder %v1713, 8.507059e+37
      %v1715 = vand.u32 %v1696, 2147483648
      %v1716 = vor.u32 1.1754944e-38, %v1715
      %v1717 = vsel %vm1714, %v1716, %v1712
      %v1718 = vmul.f32 1.0, %v1717
      %v1719 = vrcp.pop %v1697
      %v1720 = vmul.f32 %v1697, %v1719
      %v1721 = vsub.f32 1.0, %v1720
      %v1722 = vmul.f32 %v1719, %v1721
      %v1723 = vadd.f32 %v1719, %v1722
      %vm1724 = vweird.f32 %v1697
      %vm1725 = vweird.f32 %v1719
      %vm1726 = vmor %vm1724, %vm1725
      %v1727 = vsel %vm1726, %v1719, %v1723
      %v1728 = vand.u32 2147483647, %v1697
      %vm1729 = vcmp.eq.f32.partialorder %v1728, 8.507059e+37
      %v1730 = vand.u32 %v1697, 2147483648
      %v1731 = vor.u32 1.1754944e-38, %v1730
      %v1732 = vsel %vm1729, %v1731, %v1727
      %v1733 = vmul.f32 1.0, %v1732
      %v1734 = vrcp.pop %v1698
      %v1735 = vmul.f32 %v1698, %v1734
      %v1736 = vsub.f32 1.0, %v1735
      %v1737 = vmul.f32 %v1734, %v1736
      %v1738 = vadd.f32 %v1734, %v1737
      %vm1739 = vweird.f32 %v1698
      %vm1740 = vweird.f32 %v1734
      %vm1741 = vmor %vm1739, %vm1740
      %v1742 = vsel %vm1741, %v1734, %v1738
      %v1743 = vand.u32 2147483647, %v1698
      %vm1744 = vcmp.eq.f32.partialorder %v1743, 8.507059e+37
      %v1745 = vand.u32 %v1698, 2147483648
      %v1746 = vor.u32 1.1754944e-38, %v1745
      %v1747 = vsel %vm1744, %v1746, %v1742
      %v1748 = vmul.f32 1.0, %v1747
      %v1749 = vrcp.pop %v1699
      %v1750 = vmul.f32 %v1699, %v1749
      %v1751 = vsub.f32 1.0, %v1750
      %v1752 = vmul.f32 %v1749, %v1751
      %v1753 = vadd.f32 %v1749, %v1752
      %vm1754 = vweird.f32 %v1699
      %vm1755 = vweird.f32 %v1749
      %vm1756 = vmor %vm1754, %vm1755
      %v1757 = vsel %vm1756, %v1749, %v1753
      %v1758 = vand.u32 2147483647, %v1699
      %vm1759 = vcmp.eq.f32.partialorder %v1758, 8.507059e+37
      %v1760 = vand.u32 %v1699, 2147483648
      %v1761 = vor.u32 1.1754944e-38, %v1760
      %v1762 = vsel %vm1759, %v1761, %v1757
      %v1763 = vmul.f32 1.0, %v1762
      %v1764 = vrcp.pop %v1700
      %v1765 = vmul.f32 %v1700, %v1764
      %v1766 = vsub.f32 1.0, %v1765
      %v1767 = vmul.f32 %v1764, %v1766
      %v1768 = vadd.f32 %v1764, %v1767
      %vm1769 = vweird.f32 %v1700
      %vm1770 = vweird.f32 %v1764
      %vm1771 = vmor %vm1769, %vm1770
      %v1772 = vsel %vm1771, %v1764, %v1768
      %v1773 = vand.u32 2147483647, %v1700
      %vm1774 = vcmp.eq.f32.partialorder %v1773, 8.507059e+37
      %v1775 = vand.u32 %v1700, 2147483648
      %v1776 = vor.u32 1.1754944e-38, %v1775
      %v1777 = vsel %vm1774, %v1776, %v1772
      %v1778 = vmul.f32 1.0, %v1777
      %v1779 = vrcp.pop %v1701
      %v1780 = vmul.f32 %v1701, %v1779
      %v1781 = vsub.f32 1.0, %v1780
      %v1782 = vmul.f32 %v1779, %v1781
      %v1783 = vadd.f32 %v1779, %v1782
      %vm1784 = vweird.f32 %v1701
      %vm1785 = vweird.f32 %v1779
      %vm1786 = vmor %vm1784, %vm1785
      %v1787 = vsel %vm1786, %v1779, %v1783
      %v1788 = vand.u32 2147483647, %v1701
      %vm1789 = vcmp.eq.f32.partialorder %v1788, 8.507059e+37
      %v1790 = vand.u32 %v1701, 2147483648
      %v1791 = vor.u32 1.1754944e-38, %v1790
      %v1792 = vsel %vm1789, %v1791, %v1787
      %v1793 = vmul.f32 1.0, %v1792
      %v1794 = vrcp.pop %v1702
      %v1795 = vmul.f32 %v1702, %v1794
      %v1796 = vsub.f32 1.0, %v1795
      %v1797 = vmul.f32 %v1794, %v1796
      %v1798 = vadd.f32 %v1794, %v1797
      %vm1799 = vweird.f32 %v1702
      %vm1800 = vweird.f32 %v1794
      %vm1801 = vmor %vm1799, %vm1800
      %v1802 = vsel %vm1801, %v1794, %v1798
      %v1803 = vand.u32 2147483647, %v1702
      %vm1804 = vcmp.eq.f32.partialorder %v1803, 8.507059e+37
      %v1805 = vand.u32 %v1702, 2147483648
      %v1806 = vor.u32 1.1754944e-38, %v1805
      %v1807 = vsel %vm1804, %v1806, %v1802
      %v1808 = vmul.f32 1.0, %v1807
      %v1809 = vrcp.pop %v1703
      %v1810 = vmul.f32 %v1703, %v1809
      %v1811 = vsub.f32 1.0, %v1810
      %v1812 = vmul.f32 %v1809, %v1811
      %v1813 = vadd.f32 %v1809, %v1812
      %vm1814 = vweird.f32 %v1703
      %vm1815 = vweird.f32 %v1809
      %vm1816 = vmor %vm1814, %vm1815
      %v1817 = vsel %vm1816, %v1809, %v1813
      %v1818 = vand.u32 2147483647, %v1703
      %vm1819 = vcmp.eq.f32.partialorder %v1818, 8.507059e+37
      %v1820 = vand.u32 %v1703, 2147483648
      %v1821 = vor.u32 1.1754944e-38, %v1820
      %v1822 = vsel %vm1819, %v1821, %v1817
      %v1823 = vmul.f32 1.0, %v1822
      %v1824 = vmul.f32 %v1664, %v1718
      %v1825 = vmul.f32 %v1665, %v1733
      %v1826 = vmul.f32 %v1666, %v1748
      %v1827 = vmul.f32 %v1667, %v1763
      %v1828 = vmul.f32 %v1668, %v1778
      %v1829 = vmul.f32 %v1669, %v1793
      %v1830 = vmul.f32 %v1670, %v1808
      %v1831 = vmul.f32 %v1671, %v1823
      %1832 = vst.msk [vmem:[#allocation3] sm:$0xff] %vm1288, 0.0
      %1833 = vst.msk [vmem:[#allocation3 + $0x8] sm:$0xff] %vm1288, 0.0
      %1834 = vst.msk [vmem:[#allocation3 + $0x50] sm:$0xff] %vm1288, 0.0
      %1835 = vst.msk [vmem:[#allocation3 + $0x58] sm:$0xff] %vm1288, 0.0
      %1836 = vst.msk [vmem:[#allocation3 + $0x10] sm:$0xff] %vm1288, %v1824
      %1837 = vst.msk [vmem:[#allocation3 + $0x18] sm:$0xff] %vm1288, %v1825
      %1838 = vst.msk [vmem:[#allocation3 + $0x20] sm:$0xff] %vm1288, %v1826
      %1839 = vst.msk [vmem:[#allocation3 + $0x28] sm:$0xff] %vm1288, %v1827
      %1840 = vst.msk [vmem:[#allocation3 + $0x30] sm:$0xff] %vm1288, %v1828
      %1841 = vst.msk [vmem:[#allocation3 + $0x38] sm:$0xff] %vm1288, %v1829
      %1842 = vst.msk [vmem:[#allocation3 + $0x40] sm:$0xff] %vm1288, %v1830
      %1843 = vst.msk [vmem:[#allocation3 + $0x48] sm:$0xff] %vm1288, %v1831
      %v1844 = vld [vmem:[#allocation3 + $0x7] sm:$0xff]
      %v1845 = vld [vmem:[#allocation3 + $0xf] sm:$0xff]
      %v1846 = vld [vmem:[#allocation3 + $0x17] sm:$0xff]
      %v1847 = vld [vmem:[#allocation3 + $0x1f] sm:$0xff]
      %v1848 = vld [vmem:[#allocation3 + $0x27] sm:$0xff]
      %v1849 = vld [vmem:[#allocation3 + $0x2f] sm:$0xff]
      %v1850 = vld [vmem:[#allocation3 + $0x37] sm:$0xff]
      %v1851 = vld [vmem:[#allocation3 + $0x3f] sm:$0xff]
      %v1852 = vsel %vm976, %v1844, 0.0
      %v1853 = vsel %vm977, %v1845, 0.0
      %v1854 = vsel %vm978, %v1846, 0.0
      %v1855 = vsel %vm979, %v1847, 0.0
      %v1856 = vsel %vm980, %v1848, 0.0
      %v1857 = vsel %vm981, %v1849, 0.0
      %v1858 = vsel %vm982, %v1850, 0.0
      %v1859 = vsel %vm983, %v1851, 0.0
      %v1860 = vld [vmem:[#allocation3 + $0x8] sm:$0xff]
      %v1861 = vld [vmem:[#allocation3 + $0x10] sm:$0xff]
      %v1862 = vld [vmem:[#allocation3 + $0x18] sm:$0xff]
      %v1863 = vld [vmem:[#allocation3 + $0x20] sm:$0xff]
      %v1864 = vld [vmem:[#allocation3 + $0x28] sm:$0xff]
      %v1865 = vld [vmem:[#allocation3 + $0x30] sm:$0xff]
      %v1866 = vld [vmem:[#allocation3 + $0x38] sm:$0xff]
      %v1867 = vld [vmem:[#allocation3 + $0x40] sm:$0xff]
      %v1868 = vld [vmem:[#allocation3 + $0x9] sm:$0xff]
      %v1869 = vld [vmem:[#allocation3 + $0x11] sm:$0xff]
      %v1870 = vld [vmem:[#allocation3 + $0x19] sm:$0xff]
      %v1871 = vld [vmem:[#allocation3 + $0x21] sm:$0xff]
      %v1872 = vld [vmem:[#allocation3 + $0x29] sm:$0xff]
      %v1873 = vld [vmem:[#allocation3 + $0x31] sm:$0xff]
      %v1874 = vld [vmem:[#allocation3 + $0x39] sm:$0xff]
      %v1875 = vld [vmem:[#allocation3 + $0x41] sm:$0xff]
      %v1876 = vsel %vm1016, %v1868, 0.0
      %v1877 = vsel %vm1017, %v1869, 0.0
      %v1878 = vsel %vm1018, %v1870, 0.0
      %v1879 = vsel %vm1019, %v1871, 0.0
      %v1880 = vsel %vm1020, %v1872, 0.0
      %v1881 = vsel %vm1021, %v1873, 0.0
      %v1882 = vsel %vm1022, %v1874, 0.0
      %v1883 = vsel %vm1023, %v1875, 0.0
      %v1884 = vld [vmem:[#allocation3 + $0x47] sm:$0xff]
      %v1885 = vsel %vm976, %v1845, 0.0
      %v1886 = vsel %vm977, %v1846, 0.0
      %v1887 = vsel %vm978, %v1847, 0.0
      %v1888 = vsel %vm979, %v1848, 0.0
      %v1889 = vsel %vm980, %v1849, 0.0
      %v1890 = vsel %vm981, %v1850, 0.0
      %v1891 = vsel %vm982, %v1851, 0.0
      %v1892 = vsel %vm983, %v1884, 0.0
      %v1893 = vld [vmem:[#allocation3 + $0x48] sm:$0xff]
      %v1894 = vld [vmem:[#allocation3 + $0x49] sm:$0xff]
      %v1895 = vsel %vm1016, %v1869, 0.0
      %v1896 = vsel %vm1017, %v1870, 0.0
      %v1897 = vsel %vm1018, %v1871, 0.0
      %v1898 = vsel %vm1019, %v1872, 0.0
      %v1899 = vsel %vm1020, %v1873, 0.0
      %v1900 = vsel %vm1021, %v1874, 0.0
      %v1901 = vsel %vm1022, %v1875, 0.0
      %v1902 = vsel %vm1023, %v1894, 0.0
      %v1903 = vld [vmem:[#allocation3 + $0x4f] sm:$0xff]
      %v1904 = vsel %vm976, %v1846, 0.0
      %v1905 = vsel %vm977, %v1847, 0.0
      %v1906 = vsel %vm978, %v1848, 0.0
      %v1907 = vsel %vm979, %v1849, 0.0
      %v1908 = vsel %vm980, %v1850, 0.0
      %v1909 = vsel %vm981, %v1851, 0.0
      %v1910 = vsel %vm982, %v1884, 0.0
      %v1911 = vsel %vm983, %v1903, 0.0
      %v1912 = vld [vmem:[#allocation3 + $0x50] sm:$0xff]
      %v1913 = vld [vmem:[#allocation3 + $0x51] sm:$0xff]
      %v1914 = vsel %vm1016, %v1870, 0.0
      %v1915 = vsel %vm1017, %v1871, 0.0
      %v1916 = vsel %vm1018, %v1872, 0.0
      %v1917 = vsel %vm1019, %v1873, 0.0
      %v1918 = vsel %vm1020, %v1874, 0.0
      %v1919 = vsel %vm1021, %v1875, 0.0
      %v1920 = vsel %vm1022, %v1894, 0.0
      %v1921 = vsel %vm1023, %v1913, 0.0
      %1930 = vrot.lane.b32.xlu0 %v1860, 32
      %v1931 = vpop.permute.xlu0 %1930
      %1932 = vrot.lane.b32.xlu0 %v1861, 32
      %v1933 = vpop.permute.xlu0 %1932
      %1934 = vrot.lane.b32.xlu0 %v1862, 32
      %v1935 = vpop.permute.xlu0 %1934
      %1936 = vrot.lane.b32.xlu0 %v1863, 32
      %v1937 = vpop.permute.xlu0 %1936
      %1938 = vrot.lane.b32.xlu0 %v1864, 32
      %v1939 = vpop.permute.xlu0 %1938
      %1940 = vrot.lane.b32.xlu0 %v1865, 32
      %v1941 = vpop.permute.xlu0 %1940
      %1942 = vrot.lane.b32.xlu0 %v1866, 32
      %v1943 = vpop.permute.xlu0 %1942
      %1944 = vrot.lane.b32.xlu0 %v1867, 32
      %v1945 = vpop.permute.xlu0 %1944
      %1962 = vrot.lane.b32.xlu0 %v1876, 64
      %v1963 = vpop.permute.xlu0 %1962
      %1964 = vrot.lane.b32.xlu0 %v1877, 64
      %v1965 = vpop.permute.xlu0 %1964
      %1966 = vrot.lane.b32.xlu0 %v1878, 64
      %v1967 = vpop.permute.xlu0 %1966
      %1968 = vrot.lane.b32.xlu0 %v1879, 64
      %v1969 = vpop.permute.xlu0 %1968
      %1970 = vrot.lane.b32.xlu0 %v1880, 64
      %v1971 = vpop.permute.xlu0 %1970
      %1972 = vrot.lane.b32.xlu0 %v1881, 64
      %v1973 = vpop.permute.xlu0 %1972
      %1974 = vrot.lane.b32.xlu0 %v1882, 64
      %v1975 = vpop.permute.xlu0 %1974
      %1976 = vrot.lane.b32.xlu0 %v1883, 64
      %v1977 = vpop.permute.xlu0 %1976
      %1994 = vrot.lane.b32.xlu0 %v1885, 96
      %v1995 = vpop.permute.xlu0 %1994
      %1996 = vrot.lane.b32.xlu0 %v1886, 96
      %v1997 = vpop.permute.xlu0 %1996
      %1998 = vrot.lane.b32.xlu0 %v1887, 96
      %v1999 = vpop.permute.xlu0 %1998
      %2000 = vrot.lane.b32.xlu0 %v1888, 96
      %v2001 = vpop.permute.xlu0 %2000
      %2002 = vrot.lane.b32.xlu0 %v1889, 96
      %v2003 = vpop.permute.xlu0 %2002
      %2004 = vrot.lane.b32.xlu0 %v1890, 96
      %v2005 = vpop.permute.xlu0 %2004
      %2006 = vrot.lane.b32.xlu0 %v1891, 96
      %v2007 = vpop.permute.xlu0 %2006
      %2008 = vrot.lane.b32.xlu0 %v1892, 96
      %v2009 = vpop.permute.xlu0 %2008
      %2026 = vrot.lane.b32.xlu0 %v1895, 32
      %v2027 = vpop.permute.xlu0 %2026
      %2028 = vrot.lane.b32.xlu0 %v1896, 32
      %v2029 = vpop.permute.xlu0 %2028
      %2030 = vrot.lane.b32.xlu0 %v1897, 32
      %v2031 = vpop.permute.xlu0 %2030
      %2032 = vrot.lane.b32.xlu0 %v1898, 32
      %v2033 = vpop.permute.xlu0 %2032
      %2034 = vrot.lane.b32.xlu0 %v1899, 32
      %v2035 = vpop.permute.xlu0 %2034
      %2036 = vrot.lane.b32.xlu0 %v1900, 32
      %v2037 = vpop.permute.xlu0 %2036
      %2038 = vrot.lane.b32.xlu0 %v1901, 32
      %v2039 = vpop.permute.xlu0 %2038
      %2040 = vrot.lane.b32.xlu0 %v1902, 32
      %v2041 = vpop.permute.xlu0 %2040
      %2058 = vrot.lane.b32.xlu0 %v1904, 64
      %v2059 = vpop.permute.xlu0 %2058
      %2060 = vrot.lane.b32.xlu0 %v1905, 64
      %v2061 = vpop.permute.xlu0 %2060
      %2062 = vrot.lane.b32.xlu0 %v1906, 64
      %v2063 = vpop.permute.xlu0 %2062
      %2064 = vrot.lane.b32.xlu0 %v1907, 64
      %v2065 = vpop.permute.xlu0 %2064
      %2066 = vrot.lane.b32.xlu0 %v1908, 64
      %v2067 = vpop.permute.xlu0 %2066
      %2068 = vrot.lane.b32.xlu0 %v1909, 64
      %v2069 = vpop.permute.xlu0 %2068
      %2070 = vrot.lane.b32.xlu0 %v1910, 64
      %v2071 = vpop.permute.xlu0 %2070
      %2072 = vrot.lane.b32.xlu0 %v1911, 64
      %v2073 = vpop.permute.xlu0 %2072
      %2084 = vrot.lane.b32.xlu0 %v1862, 96
      %v2085 = vpop.permute.xlu0 %2084
      %2086 = vrot.lane.b32.xlu0 %v1863, 96
      %v2087 = vpop.permute.xlu0 %2086
      %2088 = vrot.lane.b32.xlu0 %v1864, 96
      %v2089 = vpop.permute.xlu0 %2088
      %2090 = vrot.lane.b32.xlu0 %v1865, 96
      %v2091 = vpop.permute.xlu0 %2090
      %2092 = vrot.lane.b32.xlu0 %v1866, 96
      %v2093 = vpop.permute.xlu0 %2092
      %2094 = vrot.lane.b32.xlu0 %v1867, 96
      %v2095 = vpop.permute.xlu0 %2094
      %2096 = vrot.lane.b32.xlu0 %v1893, 96
      %v2097 = vpop.permute.xlu0 %2096
      %2098 = vrot.lane.b32.xlu0 %v1912, 96
      %v2099 = vpop.permute.xlu0 %2098
      %2116 = vrot.lane.b32.xlu0 %v621, 32
      %v2117 = vpop.permute.xlu0 %2116
      %2118 = vrot.lane.b32.xlu0 %v622, 32
      %v2119 = vpop.permute.xlu0 %2118
      %2120 = vrot.lane.b32.xlu0 %v623, 32
      %v2121 = vpop.permute.xlu0 %2120
      %2122 = vrot.lane.b32.xlu0 %v624, 32
      %v2123 = vpop.permute.xlu0 %2122
      %2124 = vrot.lane.b32.xlu0 %v625, 32
      %v2125 = vpop.permute.xlu0 %2124
      %2126 = vrot.lane.b32.xlu0 %v626, 32
      %v2127 = vpop.permute.xlu0 %2126
      %2128 = vrot.lane.b32.xlu0 %v627, 32
      %v2129 = vpop.permute.xlu0 %2128
      %2130 = vrot.lane.b32.xlu0 %v628, 32
      %v2131 = vpop.permute.xlu0 %2130
      %v2140 = vsel %vm1288, %v1852, %v1931
      %v2141 = vsel %vm1288, %v1853, %v1933
      %v2142 = vsel %vm1288, %v1854, %v1935
      %v2143 = vsel %vm1288, %v1855, %v1937
      %v2144 = vsel %vm1288, %v1856, %v1939
      %v2145 = vsel %vm1288, %v1857, %v1941
      %v2146 = vsel %vm1288, %v1858, %v1943
      %v2147 = vsel %vm1288, %v1859, %v1945
      %v2148 = vsel %vm1306, %v2140, %v1963
      %v2149 = vsel %vm1306, %v2141, %v1965
      %v2150 = vsel %vm1306, %v2142, %v1967
      %v2151 = vsel %vm1306, %v2143, %v1969
      %v2152 = vsel %vm1306, %v2144, %v1971
      %v2153 = vsel %vm1306, %v2145, %v1973
      %v2154 = vsel %vm1306, %v2146, %v1975
      %v2155 = vsel %vm1306, %v2147, %v1977
      %v2156 = vsel %vm1324, %v2148, %v1995
      %v2157 = vsel %vm1324, %v2149, %v1997
      %v2158 = vsel %vm1324, %v2150, %v1999
      %v2159 = vsel %vm1324, %v2151, %v2001
      %v2160 = vsel %vm1324, %v2152, %v2003
      %v2161 = vsel %vm1324, %v2153, %v2005
      %v2162 = vsel %vm1324, %v2154, %v2007
      %v2163 = vsel %vm1324, %v2155, %v2009
      %v2164 = vsel %vm1288, %v1861, %v2027
      %v2165 = vsel %vm1288, %v1862, %v2029
      %v2166 = vsel %vm1288, %v1863, %v2031
      %v2167 = vsel %vm1288, %v1864, %v2033
      %v2168 = vsel %vm1288, %v1865, %v2035
      %v2169 = vsel %vm1288, %v1866, %v2037
      %v2170 = vsel %vm1288, %v1867, %v2039
      %v2171 = vsel %vm1288, %v1893, %v2041
      %v2172 = vsel %vm1306, %v2164, %v2059
      %v2173 = vsel %vm1306, %v2165, %v2061
      %v2174 = vsel %vm1306, %v2166, %v2063
      %v2175 = vsel %vm1306, %v2167, %v2065
      %v2176 = vsel %vm1306, %v2168, %v2067
      %v2177 = vsel %vm1306, %v2169, %v2069
      %v2178 = vsel %vm1306, %v2170, %v2071
      %v2179 = vsel %vm1306, %v2171, %v2073
      %v2180 = vsel %vm1324, %v2172, %v2085
      %v2181 = vsel %vm1324, %v2173, %v2087
      %v2182 = vsel %vm1324, %v2174, %v2089
      %v2183 = vsel %vm1324, %v2175, %v2091
      %v2184 = vsel %vm1324, %v2176, %v2093
      %v2185 = vsel %vm1324, %v2177, %v2095
      %v2186 = vsel %vm1324, %v2178, %v2097
      %v2187 = vsel %vm1324, %v2179, %v2099
      %v2188 = vsel %vm1288, %v1914, %v2117
      %v2189 = vsel %vm1288, %v1915, %v2119
      %v2190 = vsel %vm1288, %v1916, %v2121
      %v2191 = vsel %vm1288, %v1917, %v2123
      %v2192 = vsel %vm1288, %v1918, %v2125
      %v2193 = vsel %vm1288, %v1919, %v2127
      %v2194 = vsel %vm1288, %v1920, %v2129
      %v2195 = vsel %vm1288, %v1921, %v2131
      %v2196 = vld [vmem:[%s12] sm:$0xff]
      %v2197 = vld [vmem:[%s12 + $0x8] sm:$0xff]
      %v2198 = vld [vmem:[%s12 + $0x10] sm:$0xff]
      %v2199 = vld [vmem:[%s12 + $0x18] sm:$0xff]
      %v2200 = vld [vmem:[%s12 + $0x20] sm:$0xff]
      %v2201 = vld [vmem:[%s12 + $0x28] sm:$0xff]
      %v2202 = vld [vmem:[%s12 + $0x30] sm:$0xff]
      %v2203 = vld [vmem:[%s12 + $0x38] sm:$0xff]
      %v2204 = vld [vmem:[%s12 + $0x40] sm:$0xff]
      %v2205 = vld [vmem:[%s12 + $0x48] sm:$0xff]
      %v2206 = vld [vmem:[%s12 + $0x50] sm:$0xff]
      %v2207 = vld [vmem:[%s12 + $0x58] sm:$0xff]
      %v2208 = vld [vmem:[%s12 + $0x60] sm:$0xff]
      %v2209 = vld [vmem:[%s12 + $0x68] sm:$0xff]
      %v2210 = vld [vmem:[%s12 + $0x70] sm:$0xff]
      %v2211 = vld [vmem:[%s12 + $0x78] sm:$0xff]
      %v2212 = vld [vmem:[%s12 + $0x80] sm:$0xff]
      %v2213 = vld [vmem:[%s12 + $0x88] sm:$0xff]
      %v2214 = vld [vmem:[%s12 + $0x90] sm:$0xff]
      %v2215 = vld [vmem:[%s12 + $0x98] sm:$0xff]
      %v2216 = vld [vmem:[%s12 + $0xa0] sm:$0xff]
      %v2217 = vld [vmem:[%s12 + $0xa8] sm:$0xff]
      %v2218 = vld [vmem:[%s12 + $0xb0] sm:$0xff]
      %v2219 = vld [vmem:[%s12 + $0xb8] sm:$0xff]
      %v2220 = vld [vmem:[%s12 + $0xc0] sm:$0xff]
      %v2221 = vld [vmem:[%s12 + $0xc8] sm:$0xff]
      %v2222 = vld [vmem:[%s12 + $0xd0] sm:$0xff]
      %v2223 = vld [vmem:[%s12 + $0xd8] sm:$0xff]
      %v2224 = vld [vmem:[%s12 + $0xe0] sm:$0xff]
      %v2225 = vld [vmem:[%s12 + $0xe8] sm:$0xff]
      %v2226 = vld [vmem:[%s12 + $0xf0] sm:$0xff]
      %v2227 = vld [vmem:[%s12 + $0xf8] sm:$0xff]
      %v2228 = vld [vmem:[%s12 + $0x100] sm:$0xff]
      %v2229 = vld [vmem:[%s12 + $0x108] sm:$0xff]
      %v2230 = vld [vmem:[%s12 + $0x110] sm:$0xff]
      %v2231 = vld [vmem:[%s12 + $0x118] sm:$0xff]
      %v2232 = vld [vmem:[%s12 + $0x120] sm:$0xff]
      %v2233 = vld [vmem:[%s12 + $0x128] sm:$0xff]
      %v2234 = vld [vmem:[%s13] sm:$0x1]
      %v2236 = vperm.slane %v2234, 0
      %v2239 = vsel %vm1297, %v2188, 0
      %v2242 = vsel %vm1297, %v2189, 0
      %v2245 = vsel %vm1297, %v2190, 0
      %v2248 = vsel %vm1297, %v2191, 0
      %v2251 = vsel %vm1297, %v2192, 0
      %v2254 = vsel %vm1297, %v2193, 0
      %v2257 = vsel %vm1297, %v2194, 0
      %v2260 = vsel %vm1297, %v2195, 0
      %2262 = vmatpush.msra.mxu0 %v2211
      %2263 = vmatpush.msra.mxu0 %v2210
      %2264 = vmatpush.msra.mxu0 %v2209
      %2265 = vmatpush.msra.mxu0 %v2208
      %2266 = vmatpush.msra.mxu0 %v2207
      %2267 = vmatpush.msra.mxu0 %v2206
      %2268 = vmatpush.msra.mxu0 %v2205
      %2269 = vmatpush.msra.mxu0 %v2204
      %2270 = vmatpush.msra.mxu0 %v2203
      %2271 = vmatpush.msra.mxu0 %v2202
      %2272 = vmatpush.msra.mxu0 %v2201
      %2273 = vmatpush.msra.mxu0 %v2200
      %2274 = vmatpush.msra.mxu0 %v2199
      %2275 = vmatpush.msra.mxu0 %v2198
      %2276 = vmatpush.msra.mxu0 %v2197
      %2277 = vmatpush.msra.mxu0 %v2196
      %2278 = vmatmul.f32.gmra.mxu0 %v2156
      %v2279 = vpop.f32.mrf.mxu0
      %v2280 = vadd.f32 %v2236, %v2279
      %2281 = vmatmul.f32.gmra.mxu0 %v2157
      %v2282 = vpop.f32.mrf.mxu0
      %v2283 = vadd.f32 %v2236, %v2282
      %2284 = vmatmul.f32.gmra.mxu0 %v2158
      %v2285 = vpop.f32.mrf.mxu0
      %v2286 = vadd.f32 %v2236, %v2285
      %2287 = vmatmul.f32.gmra.mxu0 %v2159
      %v2288 = vpop.f32.mrf.mxu0
      %v2289 = vadd.f32 %v2236, %v2288
      %2290 = vmatmul.f32.gmra.mxu0 %v2160
      %v2291 = vpop.f32.mrf.mxu0
      %v2292 = vadd.f32 %v2236, %v2291
      %2293 = vmatmul.f32.gmra.mxu0 %v2161
      %v2294 = vpop.f32.mrf.mxu0
      %v2295 = vadd.f32 %v2236, %v2294
      %2296 = vmatmul.f32.gmra.mxu0 %v2162
      %v2297 = vpop.f32.mrf.mxu0
      %v2298 = vadd.f32 %v2236, %v2297
      %2299 = vmatmul.f32.gmra.mxu0 %v2163
      %v2300 = vpop.f32.mrf.mxu0
      %v2301 = vadd.f32 %v2236, %v2300
      %2302 = vdwg.mxu0
      %2303 = vmatpush.msra.mxu0 %v2227
      %2304 = vmatpush.msra.mxu0 %v2226
      %2305 = vmatpush.msra.mxu0 %v2225
      %2306 = vmatpush.msra.mxu0 %v2224
      %2307 = vmatpush.msra.mxu0 %v2223
      %2308 = vmatpush.msra.mxu0 %v2222
      %2309 = vmatpush.msra.mxu0 %v2221
      %2310 = vmatpush.msra.mxu0 %v2220
      %2311 = vmatpush.msra.mxu0 %v2219
      %2312 = vmatpush.msra.mxu0 %v2218
      %2313 = vmatpush.msra.mxu0 %v2217
      %2314 = vmatpush.msra.mxu0 %v2216
      %2315 = vmatpush.msra.mxu0 %v2215
      %2316 = vmatpush.msra.mxu0 %v2214
      %2317 = vmatpush.msra.mxu0 %v2213
      %2318 = vmatpush.msra.mxu0 %v2212
      %2319 = vmatmul.f32.gmra.mxu0 %v2180
      %v2320 = vpop.f32.mrf.mxu0
      %v2321 = vadd.f32 %v2280, %v2320
      %2322 = vmatmul.f32.gmra.mxu0 %v2181
      %v2323 = vpop.f32.mrf.mxu0
      %v2324 = vadd.f32 %v2283, %v2323
      %2325 = vmatmul.f32.gmra.mxu0 %v2182
      %v2326 = vpop.f32.mrf.mxu0
      %v2327 = vadd.f32 %v2286, %v2326
      %2328 = vmatmul.f32.gmra.mxu0 %v2183
      %v2329 = vpop.f32.mrf.mxu0
      %v2330 = vadd.f32 %v2289, %v2329
      %2331 = vmatmul.f32.gmra.mxu0 %v2184
      %v2332 = vpop.f32.mrf.mxu0
      %v2333 = vadd.f32 %v2292, %v2332
      %2334 = vmatmul.f32.gmra.mxu0 %v2185
      %v2335 = vpop.f32.mrf.mxu0
      %v2336 = vadd.f32 %v2295, %v2335
      %2337 = vmatmul.f32.gmra.mxu0 %v2186
      %v2338 = vpop.f32.mrf.mxu0
      %v2339 = vadd.f32 %v2298, %v2338
      %2340 = vmatmul.f32.gmra.mxu0 %v2187
      %v2341 = vpop.f32.mrf.mxu0
      %v2342 = vadd.f32 %v2301, %v2341
      %2343 = vdwg.mxu0
      %2344 = vmatpush.msra.mxu0 0.0
      %2345 = vmatpush.msra.mxu0 0.0
      %2346 = vmatpush.msra.mxu0 0.0
      %2347 = vmatpush.msra.mxu0 0.0
      %2348 = vmatpush.msra.mxu0 0.0
      %2349 = vmatpush.msra.mxu0 0.0
      %2350 = vmatpush.msra.mxu0 0.0
      %2351 = vmatpush.msra.mxu0 0.0
      %2352 = vmatpush.msra.mxu0 0.0
      %2353 = vmatpush.msra.mxu0 0.0
      %2354 = vmatpush.msra.mxu0 %v2233
      %2355 = vmatpush.msra.mxu0 %v2232
      %2356 = vmatpush.msra.mxu0 %v2231
      %2357 = vmatpush.msra.mxu0 %v2230
      %2358 = vmatpush.msra.mxu0 %v2229
      %2359 = vmatpush.msra.mxu0 %v2228
      %2360 = vmatmul.f32.gmra.mxu0 %v2239
      %v2361 = vpop.f32.mrf.mxu0
      %v2362 = vadd.f32 %v2321, %v2361
      %2363 = vmatmul.f32.gmra.mxu0 %v2242
      %v2364 = vpop.f32.mrf.mxu0
      %v2365 = vadd.f32 %v2324, %v2364
      %2366 = vmatmul.f32.gmra.mxu0 %v2245
      %v2367 = vpop.f32.mrf.mxu0
      %v2368 = vadd.f32 %v2327, %v2367
      %2369 = vmatmul.f32.gmra.mxu0 %v2248
      %v2370 = vpop.f32.mrf.mxu0
      %v2371 = vadd.f32 %v2330, %v2370
      %2372 = vmatmul.f32.gmra.mxu0 %v2251
      %v2373 = vpop.f32.mrf.mxu0
      %v2374 = vadd.f32 %v2333, %v2373
      %2375 = vmatmul.f32.gmra.mxu0 %v2254
      %v2376 = vpop.f32.mrf.mxu0
      %v2377 = vadd.f32 %v2336, %v2376
      %2378 = vmatmul.f32.gmra.mxu0 %v2257
      %v2379 = vpop.f32.mrf.mxu0
      %v2380 = vadd.f32 %v2339, %v2379
      %2381 = vmatmul.f32.gmra.mxu0 %v2260
      %v2382 = vpop.f32.mrf.mxu0
      %v2383 = vadd.f32 %v2342, %v2382
      %2384 = vdwg.mxu0
      %2385 = vxpose.xlu0.b32.start [1/16] %v2362, 128
      %2386 = vxpose.xlu0.b32.cont [2/16] %v2365, 128
      %2387 = vxpose.xlu0.b32.cont [3/16] %v2368, 128
      %2388 = vxpose.xlu0.b32.cont [4/16] %v2371, 128
      %2389 = vxpose.xlu0.b32.cont [5/16] %v2374, 128
      %2390 = vxpose.xlu0.b32.cont [6/16] %v2377, 128
      %2391 = vxpose.xlu0.b32.cont [7/16] %v2380, 128
      %2392 = vxpose.xlu0.b32.cont [8/16] %v2383, 128
      %2393 = vxpose.xlu0.b32.cont [9/16] 0.0, 128
      %2394 = vxpose.xlu0.b32.cont [10/16] 0.0, 128
      %2395 = vxpose.xlu0.b32.cont [11/16] 0.0, 128
      %2396 = vxpose.xlu0.b32.cont [12/16] 0.0, 128
      %2397 = vxpose.xlu0.b32.cont [13/16] 0.0, 128
      %2398 = vxpose.xlu0.b32.cont [14/16] 0.0, 128
      %2399 = vxpose.xlu0.b32.cont [15/16] 0.0, 128
      %2400 = vxpose.xlu0.b32.end [16/16] 0.0, 128
      %v2401 = vpop.trf.xlu0
      %v2402 = vpop.trf.xlu0
      %v2403 = vpop.trf.xlu0
      %v2404 = vpop.trf.xlu0
      %v2405 = vpop.trf.xlu0
      %v2406 = vpop.trf.xlu0
      %v2407 = vpop.trf.xlu0
      %v2408 = vpop.trf.xlu0
      %v2409 = vpop.trf.xlu0
      %v2410 = vpop.trf.xlu0
      %v2411 = vpop.trf.xlu0
      %v2412 = vpop.trf.xlu0
      %v2413 = vpop.trf.xlu0
      %v2414 = vpop.trf.xlu0
      %v2415 = vpop.trf.xlu0
      %v2416 = vpop.trf.xlu0
      %2417 = vst.msk [vmem:[%s481] sm:$0xff] %vm1306, %v2401
      %2418 = vst.msk [vmem:[%s481 + $0x8] sm:$0xff] %vm1306, %v2402
      %2419 = vst.msk [vmem:[%s481 + $0x10] sm:$0xff] %vm1306, %v2403
      %2420 = vst.msk [vmem:[%s481 + $0x18] sm:$0xff] %vm1306, %v2404
      %p2421 = scmp.lt.s32.totalorder %s25, 1
      %s2422 = scalar_select %p2421, %s25, 1
      %s2423 = smul.addr %s2422, 4
      %s2424 = smul.addr %s2423, 8
      %s2425 = scalar_lea.vmem %s14, %s2424
      // Predicated region
      $region77: #{resnet_block_forward.1} parent=75 // pred_check
        %p2426 = pneg %p347
      $region78: #{resnet_block_forward.1} parent=75 // pred_check_branch
        %2428 = sbr.rel (%p2426) target = $region80
      $region79: #{resnet_block_forward.1} parent=75 // pred_region
        _
      $region80: #{resnet_block_forward.1} parent=75 // pred_fallthru
        _
    $region76: #{resnet_block_forward.1} parent=5 // pred_fallthru
      _
    %p2429 = scmp.le.s32.totalorder 2, %s20
    // Predicated region
    $region81: #{resnet_block_forward.1} parent=5 // pred_check
      %p2430 = pneg %p2429
    $region82: #{resnet_block_forward.1} parent=5 // pred_check_branch
      %2432 = sbr.rel (%p2430) target = $region84
    $region83: #{resnet_block_forward.1} parent=5 // pred_region
      %s2433 = ssub.s32 %s20, 2
      // Predicated region
      $region85: #{resnet_block_forward.1} parent=83 // pred_check
        %p2434 = pneg %p353
      $region86: #{resnet_block_forward.1} parent=83 // pred_check_branch
        %2436 = sbr.rel (%p2434) target = $region88
      $region87: #{resnet_block_forward.1} parent=83 // pred_region
        %p2437 = scmp.lt.s32.totalorder %s26, 1
        %s2438 = scalar_select %p2437, %s26, 1
        %s2439 = smul.addr %s2438, 4
        %s2440 = smul.addr %s2439, 8
        %s2441 = scalar_lea.vmem %s14, %s2440
      $region88: #{resnet_block_forward.1} parent=83 // pred_fallthru
        _
    $region84: #{resnet_block_forward.1} parent=5 // pred_fallthru
      _
  $region6: #{resnet_block_forward.1} parent=0 // loop_footer
    %s24 = sadd.s32 1, %s20
  $region7: #{resnet_block_forward.1} parent=0 // loop_footer_branch
    %19 = sbr.rel target = $region3
  $region8: #{resnet_block_forward.1} parent=0 // loop_exit
    _

</llo_original>
